<compile_context>
chip_gen: v6e
topology: v6e:2x2x1
jax: 0.10.0
libtpu: 0.0.40
codegen_flags: <defaults>
</compile_context>

<pallas_src>
import jax
import jax.numpy as jnp
from jax import lax
from jax.experimental import pallas as pl
from jax.experimental.pallas import tpu as pltpu

LANE = 128


def _round_up(x, m):
    return ((x + m - 1) // m) * m


def _make_kernel(H_out, W_out, kH, kW, stride, Cw, Cop, num_ctiles, HB, mm_dtype):
    def kernel(x_ref, col_ref, row_ref, pw_ref, bias_ref, o_ref, *scratch):
        # x_ref:   (1, Hp, Wp, Cw)   spatially padded NHWC input (one batch, one channel tile)
        # col_ref: (kH, Cw)          SparseConv column factor (this channel tile)
        # row_ref: (kW, Cw)          SparseConv row factor
        # pw_ref:  (Ctot, Cop)       pointwise weight, DMA'd once, VMEM-resident
        # bias_ref:(1, Cop)          pointwise bias (zeros if bias=False)
        # o_ref:   (1, H_out, W_out, Cop)
        # scratch: (acc_ref,) only when num_ctiles > 1
        acc_ref = scratch[0] if num_ctiles > 1 else None
        c = pl.program_id(1) if num_ctiles > 1 else 0

        bias = bias_ref[0, :].astype(jnp.float32)                   # (Cop,)
        col = col_ref[...].astype(jnp.float32)                      # (kH, Cw)
        row = row_ref[...].astype(jnp.float32)                      # (kW, Cw)
        if num_ctiles > 1:
            r0 = pl.multiple_of(c * Cw, Cw)
            pw = pw_ref[pl.ds(r0, Cw), :].astype(mm_dtype)           # (Cw, Cop)
        else:
            pw = pw_ref[...].astype(mm_dtype)                        # (Cw, Cop)

        # Process H_out in row chunks: both depthwise passes stay in registers
        # (no scratch read-modify-write) and the per-chunk MXU matmul overlaps
        # with the VPU work of the next chunk.
        for h0 in range(0, H_out, HB):
            hb = min(HB, H_out - h0)

            # ---- Pass 1 (H): hpass[h, w, ci] = sum_u col[u, ci] * x[h*s + u, w, ci]
            hpass = None
            for u in range(kH):
                start = h0 * stride + u
                if stride == 1:
                    xs = x_ref[0, pl.ds(start, hb), :, :]
                else:
                    xs = x_ref[0, pl.ds(start, hb, stride=stride), :, :]
                term = col[u, :] * xs.astype(jnp.float32)            # (hb, Wp, Cw)
                hpass = term if hpass is None else hpass + term

            # ---- Pass 2 (W): dw[h, w, ci] = sum_v row[v, ci] * hpass[h, w*s + v, ci]
            dwc = None
            for v in range(kW):
                if stride == 1:
                    ts = hpass[:, v:v + W_out, :]
                else:
                    ts = hpass[:, v:v + (W_out - 1) * stride + 1:stride, :]
                term = row[v, :] * ts                                # (hb, W_out, Cw)
                dwc = term if dwc is None else dwc + term

            # ---- Fused 1x1 pointwise conv chunk on the MXU.
            lhs = dwc.reshape(hb * W_out, Cw).astype(mm_dtype)
            partial = jnp.dot(lhs, pw, preferred_element_type=jnp.float32)  # (hb*W_out, Cop)

            if num_ctiles == 1:
                out = partial + bias
                o_ref[:, h0:h0 + hb, :, :] = (
                    out.reshape(1, hb, W_out, Cop).astype(o_ref.dtype))
            else:
                a0 = h0 * W_out
                nrows = hb * W_out
                nc = num_ctiles

                @pl.when(c == 0)
                def _():
                    acc_ref[pl.ds(a0, nrows), :] = partial

                @pl.when(jnp.logical_and(c > 0, c < nc - 1))
                def _():
                    acc_ref[pl.ds(a0, nrows), :] += partial

                @pl.when(c == nc - 1)
                def _():
                    total = acc_ref[pl.ds(a0, nrows), :] + partial + bias
                    o_ref[:, h0:h0 + hb, :, :] = (
                        total.reshape(1, hb, W_out, Cop).astype(o_ref.dtype))

    return kernel


def depthwise_separable_conv(x, col_kernel, row_kernel, pw_weight,
                             pw_bias=None, *, stride=1, padding=0):
    """Forward pass of DepthwiseSeparableConv.

    x:           (N, C, H, W)        NCHW, like PyTorch
    col_kernel:  (C, 1, kH, 1)       SparseConv column factor
    row_kernel:  (C, 1, 1, kW)       SparseConv row factor
    pw_weight:   (C_out, C, 1, 1)    1x1 pointwise conv weight
    pw_bias:     (C_out,) or None
    Returns (N, C_out, H_out, W_out) in NCHW.
    """
    N, C, H, W = x.shape
    kH = col_kernel.shape[2]
    kW = row_kernel.shape[3]
    C_out = pw_weight.shape[0]

    Hp, Wp = H + 2 * padding, W + 2 * padding
    H_out = (Hp - kH) // stride + 1
    W_out = (Wp - kW) // stride + 1

    # ---- Channel tiling: no padding at all when C fits a single lane group.
    if C <= LANE:
        Cw, Ctot, num_ctiles = C, C, 1
    else:
        Cw = 256 if C % 256 == 0 else LANE   # CT=256 fills the 2x256^2 MXU on v6e/v7x
        Ctot = _round_up(C, Cw)
        num_ctiles = Ctot // Cw

    HB = min(H_out, 8)                       # output-row chunk for register accumulation
    mm_dtype = jnp.bfloat16 if x.dtype == jnp.bfloat16 else jnp.float32

    # glue: NCHW -> NHWC; only the spatial halo is padded in HBM. Channels are
    # NOT lane-padded for C <= 128, so HBM traffic stays proportional to real data.
    x_nhwc = jnp.transpose(x, (0, 2, 3, 1))
    if padding > 0:
        x_nhwc = jnp.pad(x_nhwc, ((0, 0), (padding, padding),
                                  (padding, padding), (0, 0)))
    if Ctot > C:
        x_nhwc = jnp.pad(x_nhwc, ((0, 0), (0, 0), (0, 0), (0, Ctot - C)))

    # glue: lane-vector weights (zero-padded channels contribute exactly 0).
    col2d = col_kernel.reshape(C, kH).T                              # (kH, C)
    row2d = row_kernel.reshape(C, kW).T                              # (kW, C)
    pw2d = pw_weight.reshape(C_out, C).T                             # (C, C_out)
    if Ctot > C:
        col2d = jnp.pad(col2d, ((0, 0), (0, Ctot - C)))
        row2d = jnp.pad(row2d, ((0, 0), (0, Ctot - C)))
        pw2d = jnp.pad(pw2d, ((0, Ctot - C), (0, 0)))
    if pw_bias is None:
        bias2d = jnp.zeros((1, C_out), pw_weight.dtype)
    else:
        bias2d = pw_bias.reshape(1, C_out)

    kernel = _make_kernel(H_out, W_out, kH, kW, stride, Cw, C_out,
                          num_ctiles, HB, mm_dtype)

    if num_ctiles == 1:
        grid = (N,)
        sem = ("parallel",)
        in_specs = [
            pl.BlockSpec((1, Hp, Wp, Cw), lambda n: (n, 0, 0, 0)),
            pl.BlockSpec((kH, Cw), lambda n: (0, 0)),
            pl.BlockSpec((kW, Cw), lambda n: (0, 0)),
            pl.BlockSpec((Ctot, C_out), lambda n: (0, 0)),           # VMEM-resident
            pl.BlockSpec((1, C_out), lambda n: (0, 0)),
        ]
        out_specs = pl.BlockSpec((1, H_out, W_out, C_out), lambda n: (n, 0, 0, 0))
        scratch_shapes = []
    else:
        grid = (N, num_ctiles)                    # channel (reduction) axis last
        sem = ("parallel", "arbitrary")
        in_specs = [
            pl.BlockSpec((1, Hp, Wp, Cw), lambda n, c: (n, 0, 0, c)),
            pl.BlockSpec((kH, Cw), lambda n, c: (0, c)),
            pl.BlockSpec((kW, Cw), lambda n, c: (0, c)),
            pl.BlockSpec((Ctot, C_out), lambda n, c: (0, 0)),        # resident, sliced in-kernel
            pl.BlockSpec((1, C_out), lambda n, c: (0, 0)),
        ]
        out_specs = pl.BlockSpec((1, H_out, W_out, C_out), lambda n, c: (n, 0, 0, 0))
        scratch_shapes = [pltpu.VMEM((H_out * W_out, C_out), jnp.float32)]

    # Derive the scoped-VMEM budget from the actual per-step buffers
    # (double-buffered input/output blocks + resident weights + accumulator);
    # floor 32 MiB, cap 64 MiB so it stays within v7x's physical VMEM.
    isz = jnp.dtype(x.dtype).itemsize
    est = (2 * Hp * Wp * Cw * isz
           + 2 * H_out * W_out * C_out * isz
           + Ctot * C_out * isz
           + (kH + kW) * Ctot * isz
           + (H_out * W_out * C_out * 4 if num_ctiles > 1 else 0))
    vmem_limit = int(min(max(3 * est, 32 << 20), 64 << 20))

    out = pl.pallas_call(
        kernel,
        out_shape=jax.ShapeDtypeStruct((N, H_out, W_out, C_out), x.dtype),
        grid_spec=pltpu.PrefetchScalarGridSpec(
            num_scalar_prefetch=0,
            grid=grid,
            in_specs=in_specs,
            out_specs=out_specs,
            scratch_shapes=scratch_shapes,
        ),
        compiler_params=pltpu.CompilerParams(
            dimension_semantics=sem,
            vmem_limit_bytes=vmem_limit,
        ),
    )(x_nhwc, col2d, row2d, pw2d, bias2d)

    # glue: back to NCHW like PyTorch (no channel padding to strip).
    return jnp.transpose(out, (0, 3, 1, 2))


if __name__ == "__main__":
    key = jax.random.PRNGKey(0)
    k_x, k_col, k_row, k_pw = jax.random.split(key, 4)

    # small shapes consistent with the module
    N, C, H, W = 2, 4, 16, 16
    C_out = 8
    kH = kW = 3
    stride, padding = 1, 1

    x = jax.random.normal(k_x, (N, C, H, W), dtype=jnp.float32)
    col_kernel = jax.random.normal(k_col, (C, 1, kH, 1), dtype=jnp.float32)
    row_kernel = jax.random.normal(k_row, (C, 1, 1, kW), dtype=jnp.float32)
    pw_weight = jax.random.normal(k_pw, (C_out, C, 1, 1), dtype=jnp.float32)

    out = depthwise_separable_conv(x, col_kernel, row_kernel, pw_weight,
                                   pw_bias=None, stride=stride, padding=padding)
    out = jax.block_until_ready(out)

    # pure-JAX reference (same semantics as the PyTorch module forward)
    weight_dw = col_kernel * row_kernel                      # (C, 1, kH, kW)
    dw_ref = lax.conv_general_dilated(
        x, weight_dw,
        window_strides=(stride, stride),
        padding=((padding, padding), (padding, padding)),
        dimension_numbers=("NCHW", "OIHW", "NCHW"),
        feature_group_count=C,
    )
    ref = lax.conv_general_dilated(
        dw_ref, pw_weight,
        window_strides=(1, 1),
        padding=((0, 0), (0, 0)),
        dimension_numbers=("NCHW", "OIHW", "NCHW"),
    )
    assert out.shape == ref.shape, (out.shape, ref.shape)
    assert jnp.allclose(out, ref, atol=1e-4, rtol=1e-4), "mismatch vs reference"

    print("KERNEL_OK")
</pallas_src>

<mosaic_0001>
module attributes {stable_mosaic.version = 11 : i64} {
  func.func @kernel(%arg0: i32, %arg1: memref<1x18x18x4xf32, #tpu.memory_space<vmem>>, %arg2: memref<3x4xf32, #tpu.memory_space<vmem>>, %arg3: memref<3x4xf32, #tpu.memory_space<vmem>>, %arg4: memref<4x8xf32, #tpu.memory_space<vmem>>, %arg5: memref<1x8xf32, #tpu.memory_space<vmem>>, %arg6: memref<1x16x16x8xf32, #tpu.memory_space<vmem>>) attributes {dimension_semantics = [#tpu.dimension_semantics<parallel>], iteration_bounds = array<i64: 2>, scalar_prefetch = 0 : i64, scratch_operands = 0 : i64, tpu.core_type = #tpu.core_type<tc>, window_params = [{transform_indices = @transform_0, window_bounds = array<i64: 1, 18, 18, 4>}, {pipeline_mode = #tpu.pipeline_mode<synchronous>, transform_indices = @transform_1, window_bounds = array<i64: 3, 4>}, {pipeline_mode = #tpu.pipeline_mode<synchronous>, transform_indices = @transform_2, window_bounds = array<i64: 3, 4>}, {pipeline_mode = #tpu.pipeline_mode<synchronous>, transform_indices = @transform_3, window_bounds = array<i64: 4, 8>}, {pipeline_mode = #tpu.pipeline_mode<synchronous>, transform_indices = @transform_4, window_bounds = array<i64: 1, 8>}, {transform_indices = @transform_5, window_bounds = array<i64: 1, 16, 16, 8>}]} {
    %c0 = arith.constant 0 : index
    %c0_0 = arith.constant 0 : index
    %0 = vector.load %arg5[%c0, %c0_0] : memref<1x8xf32, #tpu.memory_space<vmem>>, vector<1x8xf32>
    %1 = vector.shape_cast %0 : vector<1x8xf32> to vector<8xf32>
    %c0_1 = arith.constant 0 : index
    %c0_2 = arith.constant 0 : index
    %2 = vector.load %arg2[%c0_1, %c0_2] : memref<3x4xf32, #tpu.memory_space<vmem>>, vector<3x4xf32>
    %c0_3 = arith.constant 0 : index
    %c0_4 = arith.constant 0 : index
    %3 = vector.load %arg3[%c0_3, %c0_4] : memref<3x4xf32, #tpu.memory_space<vmem>>, vector<3x4xf32>
    %c0_5 = arith.constant 0 : index
    %c0_6 = arith.constant 0 : index
    %4 = vector.load %arg4[%c0_5, %c0_6] : memref<4x8xf32, #tpu.memory_space<vmem>>, vector<4x8xf32>
    %c0_7 = arith.constant 0 : index
    %c0_8 = arith.constant 0 : index
    %c0_9 = arith.constant 0 : index
    %c0_10 = arith.constant 0 : index
    %5 = vector.load %arg1[%c0_7, %c0_8, %c0_9, %c0_10] : memref<1x18x18x4xf32, #tpu.memory_space<vmem>>, vector<1x8x18x4xf32>
    %6 = vector.shape_cast %5 : vector<1x8x18x4xf32> to vector<8x18x4xf32>
    %7 = vector.extract_strided_slice %2 {offsets = [0, 0], sizes = [1, 4], strides = [1, 1]} : vector<3x4xf32> to vector<1x4xf32>
    %8 = vector.shape_cast %7 : vector<1x4xf32> to vector<4xf32>
    %9 = vector.shape_cast %8 : vector<4xf32> to vector<1x1x4xf32>
    %10 = vector.broadcast %9 : vector<1x1x4xf32> to vector<8x18x4xf32>
    %11 = arith.mulf %10, %6 : vector<8x18x4xf32>
    %c0_11 = arith.constant 0 : index
    %c1 = arith.constant 1 : index
    %c0_12 = arith.constant 0 : index
    %c0_13 = arith.constant 0 : index
    %12 = vector.load %arg1[%c0_11, %c1, %c0_12, %c0_13] : memref<1x18x18x4xf32, #tpu.memory_space<vmem>>, vector<1x8x18x4xf32>
    %13 = vector.shape_cast %12 : vector<1x8x18x4xf32> to vector<8x18x4xf32>
    %14 = vector.extract_strided_slice %2 {offsets = [1, 0], sizes = [1, 4], strides = [1, 1]} : vector<3x4xf32> to vector<1x4xf32>
    %15 = vector.shape_cast %14 : vector<1x4xf32> to vector<4xf32>
    %16 = vector.shape_cast %15 : vector<4xf32> to vector<1x1x4xf32>
    %17 = vector.broadcast %16 : vector<1x1x4xf32> to vector<8x18x4xf32>
    %18 = arith.mulf %17, %13 : vector<8x18x4xf32>
    %19 = arith.addf %11, %18 : vector<8x18x4xf32>
    %c0_14 = arith.constant 0 : index
    %c2 = arith.constant 2 : index
    %c0_15 = arith.constant 0 : index
    %c0_16 = arith.constant 0 : index
    %20 = vector.load %arg1[%c0_14, %c2, %c0_15, %c0_16] : memref<1x18x18x4xf32, #tpu.memory_space<vmem>>, vector<1x8x18x4xf32>
    %21 = vector.shape_cast %20 : vector<1x8x18x4xf32> to vector<8x18x4xf32>
    %22 = vector.extract_strided_slice %2 {offsets = [2, 0], sizes = [1, 4], strides = [1, 1]} : vector<3x4xf32> to vector<1x4xf32>
    %23 = vector.shape_cast %22 : vector<1x4xf32> to vector<4xf32>
    %24 = vector.shape_cast %23 : vector<4xf32> to vector<1x1x4xf32>
    %25 = vector.broadcast %24 : vector<1x1x4xf32> to vector<8x18x4xf32>
    %26 = arith.mulf %25, %21 : vector<8x18x4xf32>
    %27 = arith.addf %19, %26 : vector<8x18x4xf32>
    %28 = vector.extract_strided_slice %27 {offsets = [0, 0, 0], sizes = [8, 16, 4], strides = [1, 1, 1]} : vector<8x18x4xf32> to vector<8x16x4xf32>
    %29 = vector.extract_strided_slice %3 {offsets = [0, 0], sizes = [1, 4], strides = [1, 1]} : vector<3x4xf32> to vector<1x4xf32>
    %30 = vector.shape_cast %29 : vector<1x4xf32> to vector<4xf32>
    %31 = vector.shape_cast %30 : vector<4xf32> to vector<1x1x4xf32>
    %32 = vector.broadcast %31 : vector<1x1x4xf32> to vector<8x16x4xf32>
    %33 = arith.mulf %32, %28 : vector<8x16x4xf32>
    %34 = vector.extract_strided_slice %27 {offsets = [0, 1, 0], sizes = [8, 16, 4], strides = [1, 1, 1]} : vector<8x18x4xf32> to vector<8x16x4xf32>
    %35 = vector.extract_strided_slice %3 {offsets = [1, 0], sizes = [1, 4], strides = [1, 1]} : vector<3x4xf32> to vector<1x4xf32>
    %36 = vector.shape_cast %35 : vector<1x4xf32> to vector<4xf32>
    %37 = vector.shape_cast %36 : vector<4xf32> to vector<1x1x4xf32>
    %38 = vector.broadcast %37 : vector<1x1x4xf32> to vector<8x16x4xf32>
    %39 = arith.mulf %38, %34 : vector<8x16x4xf32>
    %40 = arith.addf %33, %39 : vector<8x16x4xf32>
    %41 = vector.extract_strided_slice %27 {offsets = [0, 2, 0], sizes = [8, 16, 4], strides = [1, 1, 1]} : vector<8x18x4xf32> to vector<8x16x4xf32>
    %42 = vector.extract_strided_slice %3 {offsets = [2, 0], sizes = [1, 4], strides = [1, 1]} : vector<3x4xf32> to vector<1x4xf32>
    %43 = vector.shape_cast %42 : vector<1x4xf32> to vector<4xf32>
    %44 = vector.shape_cast %43 : vector<4xf32> to vector<1x1x4xf32>
    %45 = vector.broadcast %44 : vector<1x1x4xf32> to vector<8x16x4xf32>
    %46 = arith.mulf %45, %41 : vector<8x16x4xf32>
    %47 = arith.addf %40, %46 : vector<8x16x4xf32>
    %48 = vector.shape_cast %47 : vector<8x16x4xf32> to vector<128x4xf32>
    %cst = arith.constant dense<0.000000e+00> : vector<128x8xf32>
    %49 = tpu.matmul %48, %4, %cst {dimension_numbers = #tpu.dot_dimension_numbers<[1], [0], [0], [1], [0, 0, 1, 1], [], []>} : vector<128x4xf32>, vector<4x8xf32>, vector<128x8xf32> -> vector<128x8xf32>
    %50 = vector.shape_cast %1 : vector<8xf32> to vector<1x8xf32>
    %51 = vector.broadcast %50 : vector<1x8xf32> to vector<128x8xf32>
    %52 = arith.addf %49, %51 : vector<128x8xf32>
    %53 = vector.shape_cast %52 : vector<128x8xf32> to vector<1x8x16x8xf32>
    %c0_17 = arith.constant 0 : index
    %c0_18 = arith.constant 0 : index
    %c0_19 = arith.constant 0 : index
    %c0_20 = arith.constant 0 : index
    %54 = vector.load %arg6[%c0_17, %c0_18, %c0_19, %c0_20] : memref<1x16x16x8xf32, #tpu.memory_space<vmem>>, vector<1x8x16x8xf32>
    tpu.vector_store %arg6[%c0_17, %c0_18, %c0_19, %c0_20], %53 {strides = array<i32>} : memref<1x16x16x8xf32, #tpu.memory_space<vmem>>, vector<1x8x16x8xf32>,
    %c0_21 = arith.constant 0 : index
    %c8 = arith.constant 8 : index
    %c0_22 = arith.constant 0 : index
    %c0_23 = arith.constant 0 : index
    %55 = vector.load %arg1[%c0_21, %c8, %c0_22, %c0_23] : memref<1x18x18x4xf32, #tpu.memory_space<vmem>>, vector<1x8x18x4xf32>
    %56 = vector.shape_cast %55 : vector<1x8x18x4xf32> to vector<8x18x4xf32>
    %57 = vector.extract_strided_slice %2 {offsets = [0, 0], sizes = [1, 4], strides = [1, 1]} : vector<3x4xf32> to vector<1x4xf32>
    %58 = vector.shape_cast %57 : vector<1x4xf32> to vector<4xf32>
    %59 = vector.shape_cast %58 : vector<4xf32> to vector<1x1x4xf32>
    %60 = vector.broadcast %59 : vector<1x1x4xf32> to vector<8x18x4xf32>
    %61 = arith.mulf %60, %56 : vector<8x18x4xf32>
    %c0_24 = arith.constant 0 : index
    %c9 = arith.constant 9 : index
    %c0_25 = arith.constant 0 : index
    %c0_26 = arith.constant 0 : index
    %62 = vector.load %arg1[%c0_24, %c9, %c0_25, %c0_26] : memref<1x18x18x4xf32, #tpu.memory_space<vmem>>, vector<1x8x18x4xf32>
    %63 = vector.shape_cast %62 : vector<1x8x18x4xf32> to vector<8x18x4xf32>
    %64 = vector.extract_strided_slice %2 {offsets = [1, 0], sizes = [1, 4], strides = [1, 1]} : vector<3x4xf32> to vector<1x4xf32>
    %65 = vector.shape_cast %64 : vector<1x4xf32> to vector<4xf32>
    %66 = vector.shape_cast %65 : vector<4xf32> to vector<1x1x4xf32>
    %67 = vector.broadcast %66 : vector<1x1x4xf32> to vector<8x18x4xf32>
    %68 = arith.mulf %67, %63 : vector<8x18x4xf32>
    %69 = arith.addf %61, %68 : vector<8x18x4xf32>
    %c0_27 = arith.constant 0 : index
    %c10 = arith.constant 10 : index
    %c0_28 = arith.constant 0 : index
    %c0_29 = arith.constant 0 : index
    %70 = vector.load %arg1[%c0_27, %c10, %c0_28, %c0_29] : memref<1x18x18x4xf32, #tpu.memory_space<vmem>>, vector<1x8x18x4xf32>
    %71 = vector.shape_cast %70 : vector<1x8x18x4xf32> to vector<8x18x4xf32>
    %72 = vector.extract_strided_slice %2 {offsets = [2, 0], sizes = [1, 4], strides = [1, 1]} : vector<3x4xf32> to vector<1x4xf32>
    %73 = vector.shape_cast %72 : vector<1x4xf32> to vector<4xf32>
    %74 = vector.shape_cast %73 : vector<4xf32> to vector<1x1x4xf32>
    %75 = vector.broadcast %74 : vector<1x1x4xf32> to vector<8x18x4xf32>
    %76 = arith.mulf %75, %71 : vector<8x18x4xf32>
    %77 = arith.addf %69, %76 : vector<8x18x4xf32>
    %78 = vector.extract_strided_slice %77 {offsets = [0, 0, 0], sizes = [8, 16, 4], strides = [1, 1, 1]} : vector<8x18x4xf32> to vector<8x16x4xf32>
    %79 = vector.extract_strided_slice %3 {offsets = [0, 0], sizes = [1, 4], strides = [1, 1]} : vector<3x4xf32> to vector<1x4xf32>
    %80 = vector.shape_cast %79 : vector<1x4xf32> to vector<4xf32>
    %81 = vector.shape_cast %80 : vector<4xf32> to vector<1x1x4xf32>
    %82 = vector.broadcast %81 : vector<1x1x4xf32> to vector<8x16x4xf32>
    %83 = arith.mulf %82, %78 : vector<8x16x4xf32>
    %84 = vector.extract_strided_slice %77 {offsets = [0, 1, 0], sizes = [8, 16, 4], strides = [1, 1, 1]} : vector<8x18x4xf32> to vector<8x16x4xf32>
    %85 = vector.extract_strided_slice %3 {offsets = [1, 0], sizes = [1, 4], strides = [1, 1]} : vector<3x4xf32> to vector<1x4xf32>
    %86 = vector.shape_cast %85 : vector<1x4xf32> to vector<4xf32>
    %87 = vector.shape_cast %86 : vector<4xf32> to vector<1x1x4xf32>
    %88 = vector.broadcast %87 : vector<1x1x4xf32> to vector<8x16x4xf32>
    %89 = arith.mulf %88, %84 : vector<8x16x4xf32>
    %90 = arith.addf %83, %89 : vector<8x16x4xf32>
    %91 = vector.extract_strided_slice %77 {offsets = [0, 2, 0], sizes = [8, 16, 4], strides = [1, 1, 1]} : vector<8x18x4xf32> to vector<8x16x4xf32>
    %92 = vector.extract_strided_slice %3 {offsets = [2, 0], sizes = [1, 4], strides = [1, 1]} : vector<3x4xf32> to vector<1x4xf32>
    %93 = vector.shape_cast %92 : vector<1x4xf32> to vector<4xf32>
    %94 = vector.shape_cast %93 : vector<4xf32> to vector<1x1x4xf32>
    %95 = vector.broadcast %94 : vector<1x1x4xf32> to vector<8x16x4xf32>
    %96 = arith.mulf %95, %91 : vector<8x16x4xf32>
    %97 = arith.addf %90, %96 : vector<8x16x4xf32>
    %98 = vector.shape_cast %97 : vector<8x16x4xf32> to vector<128x4xf32>
    %cst_30 = arith.constant dense<0.000000e+00> : vector<128x8xf32>
    %99 = tpu.matmul %98, %4, %cst_30 {dimension_numbers = #tpu.dot_dimension_numbers<[1], [0], [0], [1], [0, 0, 1, 1], [], []>} : vector<128x4xf32>, vector<4x8xf32>, vector<128x8xf32> -> vector<128x8xf32>
    %100 = vector.shape_cast %1 : vector<8xf32> to vector<1x8xf32>
    %101 = vector.broadcast %100 : vector<1x8xf32> to vector<128x8xf32>
    %102 = arith.addf %99, %101 : vector<128x8xf32>
    %103 = vector.shape_cast %102 : vector<128x8xf32> to vector<1x8x16x8xf32>
    %c0_31 = arith.constant 0 : index
    %c8_32 = arith.constant 8 : index
    %c0_33 = arith.constant 0 : index
    %c0_34 = arith.constant 0 : index
    %104 = vector.load %arg6[%c0_31, %c8_32, %c0_33, %c0_34] : memref<1x16x16x8xf32, #tpu.memory_space<vmem>>, vector<1x8x16x8xf32>
    tpu.vector_store %arg6[%c0_31, %c8_32, %c0_33, %c0_34], %103 {strides = array<i32>} : memref<1x16x16x8xf32, #tpu.memory_space<vmem>>, vector<1x8x16x8xf32>,
    return
  }
  func.func @transform_0(%arg0: i32) -> (i32, i32, i32, i32) {
    %c0_i32 = arith.constant 0 : i32
    %c0_i32_0 = arith.constant 0 : i32
    %c0_i32_1 = arith.constant 0 : i32
    %c0_i32_2 = arith.constant 0 : i32
    return %arg0, %c0_i32, %c0_i32_0, %c0_i32_1 : i32, i32, i32, i32
  }
  func.func @transform_1(%arg0: i32) -> (i32, i32) {
    %c0_i32 = arith.constant 0 : i32
    %c0_i32_0 = arith.constant 0 : i32
    %c0_i32_1 = arith.constant 0 : i32
    return %c0_i32, %c0_i32_0 : i32, i32
  }
  func.func @transform_2(%arg0: i32) -> (i32, i32) {
    %c0_i32 = arith.constant 0 : i32
    %c0_i32_0 = arith.constant 0 : i32
    %c0_i32_1 = arith.constant 0 : i32
    return %c0_i32, %c0_i32_0 : i32, i32
  }
  func.func @transform_3(%arg0: i32) -> (i32, i32) {
    %c0_i32 = arith.constant 0 : i32
    %c0_i32_0 = arith.constant 0 : i32
    %c0_i32_1 = arith.constant 0 : i32
    return %c0_i32, %c0_i32_0 : i32, i32
  }
  func.func @transform_4(%arg0: i32) -> (i32, i32) {
    %c0_i32 = arith.constant 0 : i32
    %c0_i32_0 = arith.constant 0 : i32
    %c0_i32_1 = arith.constant 0 : i32
    return %c0_i32, %c0_i32_0 : i32, i32
  }
  func.func @transform_5(%arg0: i32) -> (i32, i32, i32, i32) {
    %c0_i32 = arith.constant 0 : i32
    %c0_i32_0 = arith.constant 0 : i32
    %c0_i32_1 = arith.constant 0 : i32
    %c0_i32_2 = arith.constant 0 : i32
    return %arg0, %c0_i32, %c0_i32_0, %c0_i32_1 : i32, i32, i32, i32
  }
}

</mosaic_0001>

<llo_original>
// kernel: tpu_custom_call.1
$region0: #{tpu_custom_call.1}
  #allocation0 [shape = 'u32[]', space=smem, size = 0x4, offset = 0x4, fixed_abs, tag = 'smem constant byte address 0x4 - core index']
  #allocation1 [shape = 'u32[144,128]{1,0:T(1,128)}', space=vmem, size = 0x12000, scoped, tag = 'internal scratch']
  %s0 = inlined_call_operand.vmem [shape: f32[2,18,18,4], index: 0, kind: input, shape index: {}]
  %s1 = inlined_call_operand.vmem [shape: f32[3,4], index: 1, kind: input, shape index: {}]
  %s2 = inlined_call_operand.vmem [shape: f32[3,4], index: 2, kind: input, shape index: {}]
  %s3 = inlined_call_operand.vmem [shape: f32[4,8], index: 3, kind: input, shape index: {}]
  %s4 = inlined_call_operand.vmem [shape: f32[1,8], index: 4, kind: input, shape index: {}]
  %s5 = inlined_call_operand.vmem [shape: f32[2,16,16,8], index: 5, kind: output, shape index: {}]
  %s6 = sld [smem:[#allocation0]]
  $region53: #{tpu_custom_call.1} parent=0
    _
  %s8 = ssub.s32 1, %s6
  %s9 = scalar_select 0, %s8, %s6
  loop: start=0, step=1, limit=4
  $region2: #{tpu_custom_call.1} parent=0 // loop_pre_header
    _
  $region3: #{tpu_custom_call.1} parent=0 // loop_header
    %s11 = sphi 0, %s15
    %p12 = scmp.ge.s32.totalorder %s11, 4
    %s21 = sphi 0, %s23
    %s24 = sphi 0, %s21
    %s25 = sphi 0, %s24
    %s41 = sphi 0, %s25
    %s45 = sphi 0, %s45
    %s47 = sphi 0, %s45
    %s48 = sphi 0, %s47
    %s62 = sphi 0, %s48
    %s66 = sphi 0, %s66
    %s68 = sphi 0, %s66
    %s69 = sphi 0, %s68
    %s83 = sphi 0, %s69
    %s87 = sphi 0, %s87
    %s89 = sphi 0, %s87
    %s90 = sphi 0, %s89
    %s104 = sphi 0, %s90
    %s108 = sphi 0, %s108
    %s110 = sphi 0, %s108
    %s111 = sphi 0, %s110
    %s125 = sphi 0, %s111
    %s131 = sphi 0, %s133
    %s134 = sphi 0, %s131
    %s135 = sphi 0, %s134
    %s151 = sphi 0, %s135
  $region4: #{tpu_custom_call.1} parent=0 // loop_header_branch
    %14 = sbr.rel (%p12) target = $region8
  $region5: #{tpu_custom_call.1} parent=0 // loop_body
    %s16 = ssub.s32 %s11, 1
    %s17 = ssub.s32 %s11, 2
    %s18 = sadd.s32 %s11, 1
    %s19 = ssub.s32 %s11, %s18
    %p20 = scmp.eq.s32.totalorder %s19, 0
    %s22 = sadd.s32 %s21, 1
    %s23 = scalar_select %p20, %s21, %s22
    %p26 = pneg %p20
    %p27 = scmp.eq.s32.totalorder %s11, 1
    %p28 = por %p26, %p27
    %p29 = scmp.ne.s32.totalorder %s21, %s24
    %p30 = scmp.eq.s32.totalorder %s11, 0
    %p31 = por %p29, %p30
    %p32 = scmp.ne.s32.totalorder %s21, %s24
    %p33 = scmp.eq.s32.totalorder %s16, 1
    %p34 = por %p32, %p33
    %p35 = scmp.ne.s32.totalorder %s24, %s25
    %p36 = scmp.eq.s32.totalorder %s16, 0
    %p37 = por %p35, %p36
    %p38 = scmp.ne.s32.totalorder %s24, %s25
    %p39 = scmp.eq.s32.totalorder %s17, 1
    %p40 = por %p38, %p39
    %p42 = scmp.ne.s32.totalorder %s25, %s41
    %p43 = scmp.eq.s32.totalorder %s17, 0
    %p44 = por %p42, %p43
    %s46 = sadd.s32 %s45, 1
    %p49 = scmp.eq.s32.totalorder %s11, 1
    %p50 = scmp.ne.s32.totalorder %s45, %s47
    %p51 = scmp.eq.s32.totalorder %s11, 0
    %p52 = por %p50, %p51
    %p53 = scmp.ne.s32.totalorder %s45, %s47
    %p54 = scmp.eq.s32.totalorder %s16, 1
    %p55 = por %p53, %p54
    %p56 = scmp.ne.s32.totalorder %s47, %s48
    %p57 = scmp.eq.s32.totalorder %s16, 0
    %p58 = por %p56, %p57
    %p59 = scmp.ne.s32.totalorder %s47, %s48
    %p60 = scmp.eq.s32.totalorder %s17, 1
    %p61 = por %p59, %p60
    %p63 = scmp.ne.s32.totalorder %s48, %s62
    %p64 = scmp.eq.s32.totalorder %s17, 0
    %p65 = por %p63, %p64
    %s67 = sadd.s32 %s66, 1
    %p70 = scmp.eq.s32.totalorder %s11, 1
    %p71 = scmp.ne.s32.totalorder %s66, %s68
    %p72 = scmp.eq.s32.totalorder %s11, 0
    %p73 = por %p71, %p72
    %p74 = scmp.ne.s32.totalorder %s66, %s68
    %p75 = scmp.eq.s32.totalorder %s16, 1
    %p76 = por %p74, %p75
    %p77 = scmp.ne.s32.totalorder %s68, %s69
    %p78 = scmp.eq.s32.totalorder %s16, 0
    %p79 = por %p77, %p78
    %p80 = scmp.ne.s32.totalorder %s68, %s69
    %p81 = scmp.eq.s32.totalorder %s17, 1
    %p82 = por %p80, %p81
    %p84 = scmp.ne.s32.totalorder %s69, %s83
    %p85 = scmp.eq.s32.totalorder %s17, 0
    %p86 = por %p84, %p85
    %s88 = sadd.s32 %s87, 1
    %p91 = scmp.eq.s32.totalorder %s11, 1
    %p92 = scmp.ne.s32.totalorder %s87, %s89
    %p93 = scmp.eq.s32.totalorder %s11, 0
    %p94 = por %p92, %p93
    %p95 = scmp.ne.s32.totalorder %s87, %s89
    %p96 = scmp.eq.s32.totalorder %s16, 1
    %p97 = por %p95, %p96
    %p98 = scmp.ne.s32.totalorder %s89, %s90
    %p99 = scmp.eq.s32.totalorder %s16, 0
    %p100 = por %p98, %p99
    %p101 = scmp.ne.s32.totalorder %s89, %s90
    %p102 = scmp.eq.s32.totalorder %s17, 1
    %p103 = por %p101, %p102
    %p105 = scmp.ne.s32.totalorder %s90, %s104
    %p106 = scmp.eq.s32.totalorder %s17, 0
    %p107 = por %p105, %p106
    %s109 = sadd.s32 %s108, 1
    %p112 = scmp.eq.s32.totalorder %s11, 1
    %p113 = scmp.ne.s32.totalorder %s108, %s110
    %p114 = scmp.eq.s32.totalorder %s11, 0
    %p115 = por %p113, %p114
    %p116 = scmp.ne.s32.totalorder %s108, %s110
    %p117 = scmp.eq.s32.totalorder %s16, 1
    %p118 = por %p116, %p117
    %p119 = scmp.ne.s32.totalorder %s110, %s111
    %p120 = scmp.eq.s32.totalorder %s16, 0
    %p121 = por %p119, %p120
    %p122 = scmp.ne.s32.totalorder %s110, %s111
    %p123 = scmp.eq.s32.totalorder %s17, 1
    %p124 = por %p122, %p123
    %p126 = scmp.ne.s32.totalorder %s111, %s125
    %p127 = scmp.eq.s32.totalorder %s17, 0
    %p128 = por %p126, %p127
    %s129 = ssub.s32 %s11, %s18
    %p130 = scmp.eq.s32.totalorder %s129, 0
    %s132 = sadd.s32 %s131, 1
    %s133 = scalar_select %p130, %s131, %s132
    %p136 = pneg %p130
    %p137 = scmp.eq.s32.totalorder %s11, 1
    %p138 = por %p136, %p137
    %p139 = scmp.ne.s32.totalorder %s131, %s134
    %p140 = scmp.eq.s32.totalorder %s11, 0
    %p141 = por %p139, %p140
    %p142 = scmp.ne.s32.totalorder %s131, %s134
    %p143 = scmp.eq.s32.totalorder %s16, 1
    %p144 = por %p142, %p143
    %p145 = scmp.ne.s32.totalorder %s134, %s135
    %p146 = scmp.eq.s32.totalorder %s16, 0
    %p147 = por %p145, %p146
    %p148 = scmp.ne.s32.totalorder %s134, %s135
    %p149 = scmp.eq.s32.totalorder %s17, 1
    %p150 = por %p148, %p149
    %p152 = scmp.ne.s32.totalorder %s135, %s151
    %p153 = scmp.eq.s32.totalorder %s17, 0
    %p154 = por %p152, %p153
    %p155 = scmp.le.s32.totalorder 1, %s11
    %p156 = scmp.lt.s32.totalorder %s11, 3
    %p157 = pnand %p155, %p156
    %p158 = pneg %p157
    // Predicated region
    $region9: #{tpu_custom_call.1} parent=5 // pred_check
      _
    $region10: #{tpu_custom_call.1} parent=5 // pred_check_branch
      %160 = sbr.rel (%p157) target = $region12
    $region11: #{tpu_custom_call.1} parent=5 // pred_region
      %s161 = ssub.s32 %s11, 1
      // Predicated region
      $region13: #{tpu_custom_call.1} parent=11 // pred_check
        %p162 = pneg %p58
      $region14: #{tpu_custom_call.1} parent=11 // pred_check_branch
        %164 = sbr.rel (%p162) target = $region16
      $region15: #{tpu_custom_call.1} parent=11 // pred_region
        _
      $region16: #{tpu_custom_call.1} parent=11 // pred_fallthru
        _
      // Predicated region
      $region17: #{tpu_custom_call.1} parent=11 // pred_check
        %p165 = pneg %p79
      $region18: #{tpu_custom_call.1} parent=11 // pred_check_branch
        %167 = sbr.rel (%p165) target = $region20
      $region19: #{tpu_custom_call.1} parent=11 // pred_region
        _
      $region20: #{tpu_custom_call.1} parent=11 // pred_fallthru
        _
      // Predicated region
      $region21: #{tpu_custom_call.1} parent=11 // pred_check
        %p168 = pneg %p100
      $region22: #{tpu_custom_call.1} parent=11 // pred_check_branch
        %170 = sbr.rel (%p168) target = $region24
      $region23: #{tpu_custom_call.1} parent=11 // pred_region
        _
      $region24: #{tpu_custom_call.1} parent=11 // pred_fallthru
        _
      // Predicated region
      $region25: #{tpu_custom_call.1} parent=11 // pred_check
        %p171 = pneg %p121
      $region26: #{tpu_custom_call.1} parent=11 // pred_check_branch
        %173 = sbr.rel (%p171) target = $region28
      $region27: #{tpu_custom_call.1} parent=11 // pred_region
        _
      $region28: #{tpu_custom_call.1} parent=11 // pred_fallthru
        _
    $region12: #{tpu_custom_call.1} parent=5 // pred_fallthru
      _
    %p174 = scmp.lt.s32.totalorder %s11, 2
    // Predicated region
    $region29: #{tpu_custom_call.1} parent=5 // pred_check
      %p175 = pneg %p174
    $region30: #{tpu_custom_call.1} parent=5 // pred_check_branch
      %177 = sbr.rel (%p175) target = $region32
    $region31: #{tpu_custom_call.1} parent=5 // pred_region
      // Predicated region
      $region33: #{tpu_custom_call.1} parent=31 // pred_check
        %p178 = pneg %p31
      $region34: #{tpu_custom_call.1} parent=31 // pred_check_branch
        %180 = sbr.rel (%p178) target = $region36
      $region35: #{tpu_custom_call.1} parent=31 // pred_region
        %p181 = scmp.lt.s32.totalorder %s11, 1
        %s182 = scalar_select %p181, %s11, 1
        %s183 = smul.addr %s182, 54
        %s184 = smul.addr %s183, 8
        %s185 = scalar_lea.vmem %s0, %s184
      $region36: #{tpu_custom_call.1} parent=31 // pred_fallthru
        _
    $region32: #{tpu_custom_call.1} parent=5 // pred_fallthru
      _
    %p186 = scmp.le.s32.totalorder 1, %s11
    %p187 = scmp.lt.s32.totalorder %s11, 3
    %p188 = pnand %p186, %p187
    %p189 = pneg %p188
    // Predicated region
    $region37: #{tpu_custom_call.1} parent=5 // pred_check
      _
    $region38: #{tpu_custom_call.1} parent=5 // pred_check_branch
      %191 = sbr.rel (%p188) target = $region40
    $region39: #{tpu_custom_call.1} parent=5 // pred_region
      %s192 = ssub.s32 %s11, 1
      %p193 = scmp.lt.s32.totalorder %s16, 1
      %s194 = scalar_select %p193, %s16, 1
      %s195 = smul.addr %s194, 54
      %s196 = smul.addr %s195, 8
      %s197 = scalar_lea.vmem %s0, %s196
      %p198 = pneg %p37
      %p199 = pneg %p34
      %p200 = pneg %p58
      %p201 = pneg %p55
      %p202 = pneg %p79
      %p203 = pneg %p76
      %p204 = pneg %p100
      %p205 = pneg %p97
      %p206 = pneg %p121
      %p207 = pneg %p118
      %p208 = pneg %p147
      %p209 = pneg %p144
      %p210 = scmp.lt.s32.totalorder %s16, 1
      %s211 = scalar_select %p210, %s16, 1
      %s212 = smul.addr %s211, 32
      %s213 = smul.addr %s212, 8
      %s214 = scalar_lea.vmem %s5, %s213
      %p215 = scmp.lt.s32.totalorder %s16, 1
      %s216 = scalar_select %p215, %s16, 1
      %s217 = smul.addr %s216, 54
      %s218 = smul.addr %s217, 8
      %s219 = scalar_lea.vmem %s0, %s218
      %p220 = scmp.lt.s32.totalorder %s16, 1
      %s221 = scalar_select %p220, %s16, 1
      %s222 = smul.addr %s221, 32
      %s223 = smul.addr %s222, 8
      %s224 = scalar_lea.vmem %s5, %s223
      %v225 = vld [vmem:[%s4] sm:$0x1]
      %v226 = vld [vmem:[%s1] sm:$0x7]
      %v227 = vld [vmem:[%s2] sm:$0x7]
      %v228 = vld [vmem:[%s3] sm:$0xf]
      %v229 = vld [vmem:[%s219] sm:$0xff]
      %v230 = vld [vmem:[%s219 + $0x8] sm:$0xff]
      %v231 = vld [vmem:[%s219 + $0x10] sm:$0x3]
      %v232 = vld [vmem:[%s219 + $0x18] sm:$0xff]
      %v233 = vld [vmem:[%s219 + $0x20] sm:$0xff]
      %v234 = vld [vmem:[%s219 + $0x28] sm:$0x3]
      %v235 = vld [vmem:[%s219 + $0x30] sm:$0xff]
      %v236 = vld [vmem:[%s219 + $0x38] sm:$0xff]
      %v237 = vld [vmem:[%s219 + $0x40] sm:$0x3]
      %v238 = vld [vmem:[%s219 + $0x48] sm:$0xff]
      %v239 = vld [vmem:[%s219 + $0x50] sm:$0xff]
      %v240 = vld [vmem:[%s219 + $0x58] sm:$0x3]
      %v241 = vld [vmem:[%s219 + $0x60] sm:$0xff]
      %v242 = vld [vmem:[%s219 + $0x68] sm:$0xff]
      %v243 = vld [vmem:[%s219 + $0x70] sm:$0x3]
      %v244 = vld [vmem:[%s219 + $0x78] sm:$0xff]
      %v245 = vld [vmem:[%s219 + $0x80] sm:$0xff]
      %v246 = vld [vmem:[%s219 + $0x88] sm:$0x3]
      %v247 = vld [vmem:[%s219 + $0x90] sm:$0xff]
      %v248 = vld [vmem:[%s219 + $0x98] sm:$0xff]
      %v249 = vld [vmem:[%s219 + $0xa0] sm:$0x3]
      %v250 = vld [vmem:[%s219 + $0xa8] sm:$0xff]
      %v251 = vld [vmem:[%s219 + $0xb0] sm:$0xff]
      %v252 = vld [vmem:[%s219 + $0xb8] sm:$0x3]
      %v253 = vlaneseq
      %v254 = vshrl.u32 %v253, 7
      %v255 = vsub.s32 0, %v254
      %v256 = vrot.slane %v226, %v255
      %v257 = vmul.f32 %v256, %v229
      %v258 = vmul.f32 %v256, %v230
      %v259 = vmul.f32 %v256, %v231
      %v260 = vmul.f32 %v256, %v232
      %v261 = vmul.f32 %v256, %v233
      %v262 = vmul.f32 %v256, %v234
      %v263 = vmul.f32 %v256, %v235
      %v264 = vmul.f32 %v256, %v236
      %v265 = vmul.f32 %v256, %v237
      %v266 = vmul.f32 %v256, %v238
      %v267 = vmul.f32 %v256, %v239
      %v268 = vmul.f32 %v256, %v240
      %v269 = vmul.f32 %v256, %v241
      %v270 = vmul.f32 %v256, %v242
      %v271 = vmul.f32 %v256, %v243
      %v272 = vmul.f32 %v256, %v244
      %v273 = vmul.f32 %v256, %v245
      %v274 = vmul.f32 %v256, %v246
      %v275 = vmul.f32 %v256, %v247
      %v276 = vmul.f32 %v256, %v248
      %v277 = vmul.f32 %v256, %v249
      %v278 = vmul.f32 %v256, %v250
      %v279 = vmul.f32 %v256, %v251
      %v280 = vmul.f32 %v256, %v252
      %s281 = scalar_lea.vmem %s219, 24
      %v282 = vld [vmem:[%s281] sm:$0xff]
      %v283 = vld [vmem:[%s281 + $0x8] sm:$0xff]
      %v284 = vld [vmem:[%s281 + $0x10] sm:$0x3]
      %v285 = vld [vmem:[%s281 + $0x18] sm:$0xff]
      %v286 = vld [vmem:[%s281 + $0x20] sm:$0xff]
      %v287 = vld [vmem:[%s281 + $0x28] sm:$0x3]
      %v288 = vld [vmem:[%s281 + $0x30] sm:$0xff]
      %v289 = vld [vmem:[%s281 + $0x38] sm:$0xff]
      %v290 = vld [vmem:[%s281 + $0x40] sm:$0x3]
      %v291 = vld [vmem:[%s281 + $0x48] sm:$0xff]
      %v292 = vld [vmem:[%s281 + $0x50] sm:$0xff]
      %v293 = vld [vmem:[%s281 + $0x58] sm:$0x3]
      %v294 = vld [vmem:[%s281 + $0x60] sm:$0xff]
      %v295 = vld [vmem:[%s281 + $0x68] sm:$0xff]
      %v296 = vld [vmem:[%s281 + $0x70] sm:$0x3]
      %v297 = vld [vmem:[%s281 + $0x78] sm:$0xff]
      %v298 = vld [vmem:[%s281 + $0x80] sm:$0xff]
      %v299 = vld [vmem:[%s281 + $0x88] sm:$0x3]
      %v300 = vld [vmem:[%s281 + $0x90] sm:$0xff]
      %v301 = vld [vmem:[%s281 + $0x98] sm:$0xff]
      %v302 = vld [vmem:[%s281 + $0xa0] sm:$0x3]
      %v303 = vld [vmem:[%s281 + $0xa8] sm:$0xff]
      %v304 = vld [vmem:[%s281 + $0xb0] sm:$0xff]
      %v305 = vld [vmem:[%s281 + $0xb8] sm:$0x3]
      %v306 = vlaneseq
      %v307 = vshrl.u32 %v306, 7
      %v308 = vsub.s32 1, %v307
      %v309 = vrot.slane %v226, %v308
      %v310 = vmul.f32 %v309, %v282
      %v311 = vmul.f32 %v309, %v283
      %v312 = vmul.f32 %v309, %v284
      %v313 = vmul.f32 %v309, %v285
      %v314 = vmul.f32 %v309, %v286
      %v315 = vmul.f32 %v309, %v287
      %v316 = vmul.f32 %v309, %v288
      %v317 = vmul.f32 %v309, %v289
      %v318 = vmul.f32 %v309, %v290
      %v319 = vmul.f32 %v309, %v291
      %v320 = vmul.f32 %v309, %v292
      %v321 = vmul.f32 %v309, %v293
      %v322 = vmul.f32 %v309, %v294
      %v323 = vmul.f32 %v309, %v295
      %v324 = vmul.f32 %v309, %v296
      %v325 = vmul.f32 %v309, %v297
      %v326 = vmul.f32 %v309, %v298
      %v327 = vmul.f32 %v309, %v299
      %v328 = vmul.f32 %v309, %v300
      %v329 = vmul.f32 %v309, %v301
      %v330 = vmul.f32 %v309, %v302
      %v331 = vmul.f32 %v309, %v303
      %v332 = vmul.f32 %v309, %v304
      %v333 = vmul.f32 %v309, %v305
      %v334 = vadd.f32 %v257, %v310
      %v335 = vadd.f32 %v258, %v311
      %v336 = vadd.f32 %v259, %v312
      %v337 = vadd.f32 %v260, %v313
      %v338 = vadd.f32 %v261, %v314
      %v339 = vadd.f32 %v262, %v315
      %v340 = vadd.f32 %v263, %v316
      %v341 = vadd.f32 %v264, %v317
      %v342 = vadd.f32 %v265, %v318
      %v343 = vadd.f32 %v266, %v319
      %v344 = vadd.f32 %v267, %v320
      %v345 = vadd.f32 %v268, %v321
      %v346 = vadd.f32 %v269, %v322
      %v347 = vadd.f32 %v270, %v323
      %v348 = vadd.f32 %v271, %v324
      %v349 = vadd.f32 %v272, %v325
      %v350 = vadd.f32 %v273, %v326
      %v351 = vadd.f32 %v274, %v327
      %v352 = vadd.f32 %v275, %v328
      %v353 = vadd.f32 %v276, %v329
      %v354 = vadd.f32 %v277, %v330
      %v355 = vadd.f32 %v278, %v331
      %v356 = vadd.f32 %v279, %v332
      %v357 = vadd.f32 %v280, %v333
      %s358 = scalar_lea.vmem %s219, 48
      %v359 = vld [vmem:[%s358] sm:$0xff]
      %v360 = vld [vmem:[%s358 + $0x8] sm:$0xff]
      %v361 = vld [vmem:[%s358 + $0x10] sm:$0x3]
      %v362 = vld [vmem:[%s358 + $0x18] sm:$0xff]
      %v363 = vld [vmem:[%s358 + $0x20] sm:$0xff]
      %v364 = vld [vmem:[%s358 + $0x28] sm:$0x3]
      %v365 = vld [vmem:[%s358 + $0x30] sm:$0xff]
      %v366 = vld [vmem:[%s358 + $0x38] sm:$0xff]
      %v367 = vld [vmem:[%s358 + $0x40] sm:$0x3]
      %v368 = vld [vmem:[%s358 + $0x48] sm:$0xff]
      %v369 = vld [vmem:[%s358 + $0x50] sm:$0xff]
      %v370 = vld [vmem:[%s358 + $0x58] sm:$0x3]
      %v371 = vld [vmem:[%s358 + $0x60] sm:$0xff]
      %v372 = vld [vmem:[%s358 + $0x68] sm:$0xff]
      %v373 = vld [vmem:[%s358 + $0x70] sm:$0x3]
      %v374 = vld [vmem:[%s358 + $0x78] sm:$0xff]
      %v375 = vld [vmem:[%s358 + $0x80] sm:$0xff]
      %v376 = vld [vmem:[%s358 + $0x88] sm:$0x3]
      %v377 = vld [vmem:[%s358 + $0x90] sm:$0xff]
      %v378 = vld [vmem:[%s358 + $0x98] sm:$0xff]
      %v379 = vld [vmem:[%s358 + $0xa0] sm:$0x3]
      %v380 = vld [vmem:[%s358 + $0xa8] sm:$0xff]
      %v381 = vld [vmem:[%s358 + $0xb0] sm:$0xff]
      %v382 = vld [vmem:[%s358 + $0xb8] sm:$0x3]
      %v383 = vlaneseq
      %v384 = vshrl.u32 %v383, 7
      %v385 = vsub.s32 2, %v384
      %v386 = vrot.slane %v226, %v385
      %v387 = vmul.f32 %v386, %v359
      %v388 = vmul.f32 %v386, %v360
      %v389 = vmul.f32 %v386, %v361
      %v390 = vmul.f32 %v386, %v362
      %v391 = vmul.f32 %v386, %v363
      %v392 = vmul.f32 %v386, %v364
      %v393 = vmul.f32 %v386, %v365
      %v394 = vmul.f32 %v386, %v366
      %v395 = vmul.f32 %v386, %v367
      %v396 = vmul.f32 %v386, %v368
      %v397 = vmul.f32 %v386, %v369
      %v398 = vmul.f32 %v386, %v370
      %v399 = vmul.f32 %v386, %v371
      %v400 = vmul.f32 %v386, %v372
      %v401 = vmul.f32 %v386, %v373
      %v402 = vmul.f32 %v386, %v374
      %v403 = vmul.f32 %v386, %v375
      %v404 = vmul.f32 %v386, %v376
      %v405 = vmul.f32 %v386, %v377
      %v406 = vmul.f32 %v386, %v378
      %v407 = vmul.f32 %v386, %v379
      %v408 = vmul.f32 %v386, %v380
      %v409 = vmul.f32 %v386, %v381
      %v410 = vmul.f32 %v386, %v382
      %v411 = vadd.f32 %v334, %v387
      %v412 = vadd.f32 %v335, %v388
      %v413 = vadd.f32 %v336, %v389
      %v414 = vadd.f32 %v337, %v390
      %v415 = vadd.f32 %v338, %v391
      %v416 = vadd.f32 %v339, %v392
      %v417 = vadd.f32 %v340, %v393
      %v418 = vadd.f32 %v341, %v394
      %v419 = vadd.f32 %v342, %v395
      %v420 = vadd.f32 %v343, %v396
      %v421 = vadd.f32 %v344, %v397
      %v422 = vadd.f32 %v345, %v398
      %v423 = vadd.f32 %v346, %v399
      %v424 = vadd.f32 %v347, %v400
      %v425 = vadd.f32 %v348, %v401
      %v426 = vadd.f32 %v349, %v402
      %v427 = vadd.f32 %v350, %v403
      %v428 = vadd.f32 %v351, %v404
      %v429 = vadd.f32 %v352, %v405
      %v430 = vadd.f32 %v353, %v406
      %v431 = vadd.f32 %v354, %v407
      %v432 = vadd.f32 %v355, %v408
      %v433 = vadd.f32 %v356, %v409
      %v434 = vadd.f32 %v357, %v410
      %v435 = vlaneseq
      %v436 = vshrl.u32 %v435, 7
      %v437 = vsub.s32 0, %v436
      %v438 = vrot.slane %v227, %v437
      %v439 = vmul.f32 %v438, %v411
      %v440 = vmul.f32 %v438, %v412
      %v441 = vmul.f32 %v438, %v414
      %v442 = vmul.f32 %v438, %v415
      %v443 = vmul.f32 %v438, %v417
      %v444 = vmul.f32 %v438, %v418
      %v445 = vmul.f32 %v438, %v420
      %v446 = vmul.f32 %v438, %v421
      %v447 = vmul.f32 %v438, %v423
      %v448 = vmul.f32 %v438, %v424
      %v449 = vmul.f32 %v438, %v426
      %v450 = vmul.f32 %v438, %v427
      %v451 = vmul.f32 %v438, %v429
      %v452 = vmul.f32 %v438, %v430
      %v453 = vmul.f32 %v438, %v432
      %v454 = vmul.f32 %v438, %v433
      %v455 = vlaneseq
      %v456 = vshrl.u32 %v455, 7
      %v457 = vsub.s32 1, %v456
      %v458 = vrot.slane %v227, %v457
      %v459 = vmul.f32 %v458, %v411
      %v460 = vmul.f32 %v458, %v412
      %v461 = vmul.f32 %v458, %v413
      %v462 = vmul.f32 %v458, %v414
      %v463 = vmul.f32 %v458, %v415
      %v464 = vmul.f32 %v458, %v416
      %v465 = vmul.f32 %v458, %v417
      %v466 = vmul.f32 %v458, %v418
      %v467 = vmul.f32 %v458, %v419
      %v468 = vmul.f32 %v458, %v420
      %v469 = vmul.f32 %v458, %v421
      %v470 = vmul.f32 %v458, %v422
      %v471 = vmul.f32 %v458, %v423
      %v472 = vmul.f32 %v458, %v424
      %v473 = vmul.f32 %v458, %v425
      %v474 = vmul.f32 %v458, %v426
      %v475 = vmul.f32 %v458, %v427
      %v476 = vmul.f32 %v458, %v428
      %v477 = vmul.f32 %v458, %v429
      %v478 = vmul.f32 %v458, %v430
      %v479 = vmul.f32 %v458, %v431
      %v480 = vmul.f32 %v458, %v432
      %v481 = vmul.f32 %v458, %v433
      %v482 = vmul.f32 %v458, %v434
      %vm507 = vcmask 1046528
      %v508 = vrot.slane %v459, 1
      %v509 = vrot.slane %v460, 1
      %v510 = vsel %vm507, %v508, %v509
      %v511 = vrot.slane %v461, 1
      %v512 = vsel %vm507, %v509, %v511
      %v513 = vrot.slane %v462, 1
      %v514 = vrot.slane %v463, 1
      %v515 = vsel %vm507, %v513, %v514
      %v516 = vrot.slane %v464, 1
      %v517 = vsel %vm507, %v514, %v516
      %v518 = vrot.slane %v465, 1
      %v519 = vrot.slane %v466, 1
      %v520 = vsel %vm507, %v518, %v519
      %v521 = vrot.slane %v467, 1
      %v522 = vsel %vm507, %v519, %v521
      %v523 = vrot.slane %v468, 1
      %v524 = vrot.slane %v469, 1
      %v525 = vsel %vm507, %v523, %v524
      %v526 = vrot.slane %v470, 1
      %v527 = vsel %vm507, %v524, %v526
      %v528 = vrot.slane %v471, 1
      %v529 = vrot.slane %v472, 1
      %v530 = vsel %vm507, %v528, %v529
      %v531 = vrot.slane %v473, 1
      %v532 = vsel %vm507, %v529, %v531
      %v533 = vrot.slane %v474, 1
      %v534 = vrot.slane %v475, 1
      %v535 = vsel %vm507, %v533, %v534
      %v536 = vrot.slane %v476, 1
      %v537 = vsel %vm507, %v534, %v536
      %v538 = vrot.slane %v477, 1
      %v539 = vrot.slane %v478, 1
      %v540 = vsel %vm507, %v538, %v539
      %v541 = vrot.slane %v479, 1
      %v542 = vsel %vm507, %v539, %v541
      %v543 = vrot.slane %v480, 1
      %v544 = vrot.slane %v481, 1
      %v545 = vsel %vm507, %v543, %v544
      %v546 = vrot.slane %v482, 1
      %v547 = vsel %vm507, %v544, %v546
      %v564 = vadd.f32 %v439, %v510
      %v565 = vadd.f32 %v440, %v512
      %v566 = vadd.f32 %v441, %v515
      %v567 = vadd.f32 %v442, %v517
      %v568 = vadd.f32 %v443, %v520
      %v569 = vadd.f32 %v444, %v522
      %v570 = vadd.f32 %v445, %v525
      %v571 = vadd.f32 %v446, %v527
      %v572 = vadd.f32 %v447, %v530
      %v573 = vadd.f32 %v448, %v532
      %v574 = vadd.f32 %v449, %v535
      %v575 = vadd.f32 %v450, %v537
      %v576 = vadd.f32 %v451, %v540
      %v577 = vadd.f32 %v452, %v542
      %v578 = vadd.f32 %v453, %v545
      %v579 = vadd.f32 %v454, %v547
      %v580 = vlaneseq
      %v581 = vshrl.u32 %v580, 7
      %v582 = vsub.s32 2, %v581
      %v583 = vrot.slane %v227, %v582
      %v584 = vmul.f32 %v583, %v411
      %v585 = vmul.f32 %v583, %v412
      %v586 = vmul.f32 %v583, %v413
      %v587 = vmul.f32 %v583, %v414
      %v588 = vmul.f32 %v583, %v415
      %v589 = vmul.f32 %v583, %v416
      %v590 = vmul.f32 %v583, %v417
      %v591 = vmul.f32 %v583, %v418
      %v592 = vmul.f32 %v583, %v419
      %v593 = vmul.f32 %v583, %v420
      %v594 = vmul.f32 %v583, %v421
      %v595 = vmul.f32 %v583, %v422
      %v596 = vmul.f32 %v583, %v423
      %v597 = vmul.f32 %v583, %v424
      %v598 = vmul.f32 %v583, %v425
      %v599 = vmul.f32 %v583, %v426
      %v600 = vmul.f32 %v583, %v427
      %v601 = vmul.f32 %v583, %v428
      %v602 = vmul.f32 %v583, %v429
      %v603 = vmul.f32 %v583, %v430
      %v604 = vmul.f32 %v583, %v431
      %v605 = vmul.f32 %v583, %v432
      %v606 = vmul.f32 %v583, %v433
      %v607 = vmul.f32 %v583, %v434
      %vm632 = vcmask 1045504
      %v633 = vrot.slane %v584, 2
      %v634 = vrot.slane %v585, 2
      %v635 = vsel %vm632, %v633, %v634
      %v636 = vrot.slane %v586, 2
      %v637 = vsel %vm632, %v634, %v636
      %v638 = vrot.slane %v587, 2
      %v639 = vrot.slane %v588, 2
      %v640 = vsel %vm632, %v638, %v639
      %v641 = vrot.slane %v589, 2
      %v642 = vsel %vm632, %v639, %v641
      %v643 = vrot.slane %v590, 2
      %v644 = vrot.slane %v591, 2
      %v645 = vsel %vm632, %v643, %v644
      %v646 = vrot.slane %v592, 2
      %v647 = vsel %vm632, %v644, %v646
      %v648 = vrot.slane %v593, 2
      %v649 = vrot.slane %v594, 2
      %v650 = vsel %vm632, %v648, %v649
      %v651 = vrot.slane %v595, 2
      %v652 = vsel %vm632, %v649, %v651
      %v653 = vrot.slane %v596, 2
      %v654 = vrot.slane %v597, 2
      %v655 = vsel %vm632, %v653, %v654
      %v656 = vrot.slane %v598, 2
      %v657 = vsel %vm632, %v654, %v656
      %v658 = vrot.slane %v599, 2
      %v659 = vrot.slane %v600, 2
      %v660 = vsel %vm632, %v658, %v659
      %v661 = vrot.slane %v601, 2
      %v662 = vsel %vm632, %v659, %v661
      %v663 = vrot.slane %v602, 2
      %v664 = vrot.slane %v603, 2
      %v665 = vsel %vm632, %v663, %v664
      %v666 = vrot.slane %v604, 2
      %v667 = vsel %vm632, %v664, %v666
      %v668 = vrot.slane %v605, 2
      %v669 = vrot.slane %v606, 2
      %v670 = vsel %vm632, %v668, %v669
      %v671 = vrot.slane %v607, 2
      %v672 = vsel %vm632, %v669, %v671
      %v689 = vadd.f32 %v564, %v635
      %v690 = vadd.f32 %v565, %v637
      %v691 = vadd.f32 %v566, %v640
      %v692 = vadd.f32 %v567, %v642
      %v693 = vadd.f32 %v568, %v645
      %v694 = vadd.f32 %v569, %v647
      %v695 = vadd.f32 %v570, %v650
      %v696 = vadd.f32 %v571, %v652
      %v697 = vadd.f32 %v572, %v655
      %v698 = vadd.f32 %v573, %v657
      %v699 = vadd.f32 %v574, %v660
      %v700 = vadd.f32 %v575, %v662
      %v701 = vadd.f32 %v576, %v665
      %v702 = vadd.f32 %v577, %v667
      %v703 = vadd.f32 %v578, %v670
      %v704 = vadd.f32 %v579, %v672
      %v706 = vlaneseq
      %v707 = vshrl.u32 %v706, 7
      %v708 = vsub.s32 0, %v707
      %v709 = vrot.slane %v225, %v708
      %vm711 = vcmask 31744
      %v713 = vsel %vm711, %v689, 0
      %v716 = vsel %vm711, %v690, 0
      %v719 = vsel %vm711, %v691, 0
      %v722 = vsel %vm711, %v692, 0
      %v725 = vsel %vm711, %v693, 0
      %v728 = vsel %vm711, %v694, 0
      %v731 = vsel %vm711, %v695, 0
      %v734 = vsel %vm711, %v696, 0
      %v737 = vsel %vm711, %v697, 0
      %v740 = vsel %vm711, %v698, 0
      %v743 = vsel %vm711, %v699, 0
      %v746 = vsel %vm711, %v700, 0
      %v749 = vsel %vm711, %v701, 0
      %v752 = vsel %vm711, %v702, 0
      %v755 = vsel %vm711, %v703, 0
      %v758 = vsel %vm711, %v704, 0
      %vm760 = vcmask 1043456
      %v762 = vsel %vm760, %v228, 0
      %764 = vmatprep.subr.mxu0 0.0
      %765 = vmatpush1.msra.mxu0 0.0
      %766 = vmatprep.subr.mxu0 0.0
      %767 = vmatpush1.msra.mxu0 0.0
      %768 = vmatprep.subr.mxu0 0.0
      %769 = vmatpush1.msra.mxu0 0.0
      %770 = vmatprep.subr.mxu0 0.0
      %771 = vmatpush1.msra.mxu0 0.0
      %772 = vmatprep.subr.mxu0 0.0
      %773 = vmatpush1.msra.mxu0 0.0
      %774 = vmatprep.subr.mxu0 0.0
      %775 = vmatpush1.msra.mxu0 0.0
      %776 = vmatprep.subr.mxu0 0.0
      %777 = vmatpush1.msra.mxu0 0.0
      %778 = vmatprep.subr.mxu0 0.0
      %779 = vmatpush1.msra.mxu0 0.0
      %780 = vmatprep.subr.mxu0 0.0
      %781 = vmatpush1.msra.mxu0 0.0
      %782 = vmatprep.subr.mxu0 0.0
      %783 = vmatpush1.msra.mxu0 0.0
      %784 = vmatprep.subr.mxu0 0.0
      %785 = vmatpush1.msra.mxu0 0.0
      %786 = vmatprep.subr.mxu0 0.0
      %787 = vmatpush1.msra.mxu0 0.0
      %788 = vmatprep.subr.mxu0 0.0
      %789 = vmatpush1.msra.mxu0 0.0
      %790 = vmatprep.subr.mxu0 0.0
      %791 = vmatpush1.msra.mxu0 0.0
      %792 = vmatprep.subr.mxu0 0.0
      %793 = vmatpush1.msra.mxu0 0.0
      %794 = vmatprep.subr.mxu0 0.0
      %795 = vmatpush1.msra.mxu0 %v762
      %796 = vmatprep.subr.mxu0 0.0
      %797 = vmatpush2.msra.mxu0 0.0
      %798 = vmatprep.subr.mxu0 0.0
      %799 = vmatpush2.msra.mxu0 0.0
      %800 = vmatprep.subr.mxu0 0.0
      %801 = vmatpush2.msra.mxu0 0.0
      %802 = vmatprep.subr.mxu0 0.0
      %803 = vmatpush2.msra.mxu0 0.0
      %804 = vmatprep.subr.mxu0 0.0
      %805 = vmatpush2.msra.mxu0 0.0
      %806 = vmatprep.subr.mxu0 0.0
      %807 = vmatpush2.msra.mxu0 0.0
      %808 = vmatprep.subr.mxu0 0.0
      %809 = vmatpush2.msra.mxu0 0.0
      %810 = vmatprep.subr.mxu0 0.0
      %811 = vmatpush2.msra.mxu0 0.0
      %812 = vmatprep.subr.mxu0 0.0
      %813 = vmatpush2.msra.mxu0 0.0
      %814 = vmatprep.subr.mxu0 0.0
      %815 = vmatpush2.msra.mxu0 0.0
      %816 = vmatprep.subr.mxu0 0.0
      %817 = vmatpush2.msra.mxu0 0.0
      %818 = vmatprep.subr.mxu0 0.0
      %819 = vmatpush2.msra.mxu0 0.0
      %820 = vmatprep.subr.mxu0 0.0
      %821 = vmatpush2.msra.mxu0 0.0
      %822 = vmatprep.subr.mxu0 0.0
      %823 = vmatpush2.msra.mxu0 0.0
      %824 = vmatprep.subr.mxu0 0.0
      %825 = vmatpush2.msra.mxu0 0.0
      %826 = vmatprep.subr.mxu0 0.0
      %827 = vmatpush2.msra.mxu0 0.0
      %828 = vmatprep.mubr.f32.mxu0 0.0
      %829 = vmatmul.mubr.f32.gmra.mxu0 %v713
      %v830 = vpop.f32.mrf.mxu0
      %v831 = vadd.f32 %v709, %v830
      %v832 = vpop.f32.mrf.mxu0
      %833 = vmatprep.mubr.f32.mxu0 0.0
      %834 = vmatmul.mubr.f32.gmra.mxu0 %v716
      %v835 = vpop.f32.mrf.mxu0
      %v836 = vadd.f32 %v709, %v835
      %v837 = vpop.f32.mrf.mxu0
      %838 = vmatprep.mubr.f32.mxu0 0.0
      %839 = vmatmul.mubr.f32.gmra.mxu0 %v719
      %v840 = vpop.f32.mrf.mxu0
      %v841 = vadd.f32 %v709, %v840
      %v842 = vpop.f32.mrf.mxu0
      %843 = vmatprep.mubr.f32.mxu0 0.0
      %844 = vmatmul.mubr.f32.gmra.mxu0 %v722
      %v845 = vpop.f32.mrf.mxu0
      %v846 = vadd.f32 %v709, %v845
      %v847 = vpop.f32.mrf.mxu0
      %848 = vmatprep.mubr.f32.mxu0 0.0
      %849 = vmatmul.mubr.f32.gmra.mxu0 %v725
      %v850 = vpop.f32.mrf.mxu0
      %v851 = vadd.f32 %v709, %v850
      %v852 = vpop.f32.mrf.mxu0
      %853 = vmatprep.mubr.f32.mxu0 0.0
      %854 = vmatmul.mubr.f32.gmra.mxu0 %v728
      %v855 = vpop.f32.mrf.mxu0
      %v856 = vadd.f32 %v709, %v855
      %v857 = vpop.f32.mrf.mxu0
      %858 = vmatprep.mubr.f32.mxu0 0.0
      %859 = vmatmul.mubr.f32.gmra.mxu0 %v731
      %v860 = vpop.f32.mrf.mxu0
      %v861 = vadd.f32 %v709, %v860
      %v862 = vpop.f32.mrf.mxu0
      %863 = vmatprep.mubr.f32.mxu0 0.0
      %864 = vmatmul.mubr.f32.gmra.mxu0 %v734
      %v865 = vpop.f32.mrf.mxu0
      %v866 = vadd.f32 %v709, %v865
      %v867 = vpop.f32.mrf.mxu0
      %868 = vmatprep.mubr.f32.mxu0 0.0
      %869 = vmatmul.mubr.f32.gmra.mxu0 %v737
      %v870 = vpop.f32.mrf.mxu0
      %v871 = vadd.f32 %v709, %v870
      %v872 = vpop.f32.mrf.mxu0
      %873 = vmatprep.mubr.f32.mxu0 0.0
      %874 = vmatmul.mubr.f32.gmra.mxu0 %v740
      %v875 = vpop.f32.mrf.mxu0
      %v876 = vadd.f32 %v709, %v875
      %v877 = vpop.f32.mrf.mxu0
      %878 = vmatprep.mubr.f32.mxu0 0.0
      %879 = vmatmul.mubr.f32.gmra.mxu0 %v743
      %v880 = vpop.f32.mrf.mxu0
      %v881 = vadd.f32 %v709, %v880
      %v882 = vpop.f32.mrf.mxu0
      %883 = vmatprep.mubr.f32.mxu0 0.0
      %884 = vmatmul.mubr.f32.gmra.mxu0 %v746
      %v885 = vpop.f32.mrf.mxu0
      %v886 = vadd.f32 %v709, %v885
      %v887 = vpop.f32.mrf.mxu0
      %888 = vmatprep.mubr.f32.mxu0 0.0
      %889 = vmatmul.mubr.f32.gmra.mxu0 %v749
      %v890 = vpop.f32.mrf.mxu0
      %v891 = vadd.f32 %v709, %v890
      %v892 = vpop.f32.mrf.mxu0
      %893 = vmatprep.mubr.f32.mxu0 0.0
      %894 = vmatmul.mubr.f32.gmra.mxu0 %v752
      %v895 = vpop.f32.mrf.mxu0
      %v896 = vadd.f32 %v709, %v895
      %v897 = vpop.f32.mrf.mxu0
      %898 = vmatprep.mubr.f32.mxu0 0.0
      %899 = vmatmul.mubr.f32.gmra.mxu0 %v755
      %v900 = vpop.f32.mrf.mxu0
      %v901 = vadd.f32 %v709, %v900
      %v902 = vpop.f32.mrf.mxu0
      %903 = vmatprep.mubr.f32.mxu0 0.0
      %904 = vmatmul.mubr.f32.gmra.mxu0 %v758
      %v905 = vpop.f32.mrf.mxu0
      %v906 = vadd.f32 %v709, %v905
      %v907 = vpop.f32.mrf.mxu0
      %908 = vdwg.mxu0
      %vm909 = vcmask 64512
      %910 = vst.msk [vmem:[%s224] sm:$0xff] %vm909, %v831
      %911 = vst.msk [vmem:[%s224 + $0x8] sm:$0xff] %vm909, %v836
      %912 = vst.msk [vmem:[%s224 + $0x10] sm:$0xff] %vm909, %v841
      %913 = vst.msk [vmem:[%s224 + $0x18] sm:$0xff] %vm909, %v846
      %914 = vst.msk [vmem:[%s224 + $0x20] sm:$0xff] %vm909, %v851
      %915 = vst.msk [vmem:[%s224 + $0x28] sm:$0xff] %vm909, %v856
      %916 = vst.msk [vmem:[%s224 + $0x30] sm:$0xff] %vm909, %v861
      %917 = vst.msk [vmem:[%s224 + $0x38] sm:$0xff] %vm909, %v866
      %918 = vst.msk [vmem:[%s224 + $0x40] sm:$0xff] %vm909, %v871
      %919 = vst.msk [vmem:[%s224 + $0x48] sm:$0xff] %vm909, %v876
      %920 = vst.msk [vmem:[%s224 + $0x50] sm:$0xff] %vm909, %v881
      %921 = vst.msk [vmem:[%s224 + $0x58] sm:$0xff] %vm909, %v886
      %922 = vst.msk [vmem:[%s224 + $0x60] sm:$0xff] %vm909, %v891
      %923 = vst.msk [vmem:[%s224 + $0x68] sm:$0xff] %vm909, %v896
      %924 = vst.msk [vmem:[%s224 + $0x70] sm:$0xff] %vm909, %v901
      %925 = vst.msk [vmem:[%s224 + $0x78] sm:$0xff] %vm909, %v906
      %s926 = scalar_lea.vmem %s219, 192
      %v927 = vld [vmem:[%s926] sm:$0xff]
      %v928 = vld [vmem:[%s926 + $0x8] sm:$0xff]
      %v929 = vld [vmem:[%s926 + $0x10] sm:$0x3]
      %v930 = vld [vmem:[%s926 + $0x18] sm:$0xff]
      %v931 = vld [vmem:[%s926 + $0x20] sm:$0xff]
      %v932 = vld [vmem:[%s926 + $0x28] sm:$0x3]
      %v933 = vld [vmem:[%s926 + $0x30] sm:$0xff]
      %v934 = vld [vmem:[%s926 + $0x38] sm:$0xff]
      %v935 = vld [vmem:[%s926 + $0x40] sm:$0x3]
      %v936 = vld [vmem:[%s926 + $0x48] sm:$0xff]
      %v937 = vld [vmem:[%s926 + $0x50] sm:$0xff]
      %v938 = vld [vmem:[%s926 + $0x58] sm:$0x3]
      %v939 = vld [vmem:[%s926 + $0x60] sm:$0xff]
      %v940 = vld [vmem:[%s926 + $0x68] sm:$0xff]
      %v941 = vld [vmem:[%s926 + $0x70] sm:$0x3]
      %v942 = vld [vmem:[%s926 + $0x78] sm:$0xff]
      %v943 = vld [vmem:[%s926 + $0x80] sm:$0xff]
      %v944 = vld [vmem:[%s926 + $0x88] sm:$0x3]
      %v945 = vld [vmem:[%s926 + $0x90] sm:$0xff]
      %v946 = vld [vmem:[%s926 + $0x98] sm:$0xff]
      %v947 = vld [vmem:[%s926 + $0xa0] sm:$0x3]
      %v948 = vld [vmem:[%s926 + $0xa8] sm:$0xff]
      %v949 = vld [vmem:[%s926 + $0xb0] sm:$0xff]
      %v950 = vld [vmem:[%s926 + $0xb8] sm:$0x3]
      %v951 = vmul.f32 %v256, %v927
      %v952 = vmul.f32 %v256, %v928
      %v953 = vmul.f32 %v256, %v929
      %v954 = vmul.f32 %v256, %v930
      %v955 = vmul.f32 %v256, %v931
      %v956 = vmul.f32 %v256, %v932
      %v957 = vmul.f32 %v256, %v933
      %v958 = vmul.f32 %v256, %v934
      %v959 = vmul.f32 %v256, %v935
      %v960 = vmul.f32 %v256, %v936
      %v961 = vmul.f32 %v256, %v937
      %v962 = vmul.f32 %v256, %v938
      %v963 = vmul.f32 %v256, %v939
      %v964 = vmul.f32 %v256, %v940
      %v965 = vmul.f32 %v256, %v941
      %v966 = vmul.f32 %v256, %v942
      %v967 = vmul.f32 %v256, %v943
      %v968 = vmul.f32 %v256, %v944
      %v969 = vmul.f32 %v256, %v945
      %v970 = vmul.f32 %v256, %v946
      %v971 = vmul.f32 %v256, %v947
      %v972 = vmul.f32 %v256, %v948
      %v973 = vmul.f32 %v256, %v949
      %v974 = vmul.f32 %v256, %v950
      %s975 = scalar_lea.vmem %s219, 216
      %v976 = vld [vmem:[%s975] sm:$0xff]
      %v977 = vld [vmem:[%s975 + $0x8] sm:$0xff]
      %v978 = vld [vmem:[%s975 + $0x10] sm:$0x3]
      %v979 = vld [vmem:[%s975 + $0x18] sm:$0xff]
      %v980 = vld [vmem:[%s975 + $0x20] sm:$0xff]
      %v981 = vld [vmem:[%s975 + $0x28] sm:$0x3]
      %v982 = vld [vmem:[%s975 + $0x30] sm:$0xff]
      %v983 = vld [vmem:[%s975 + $0x38] sm:$0xff]
      %v984 = vld [vmem:[%s975 + $0x40] sm:$0x3]
      %v985 = vld [vmem:[%s975 + $0x48] sm:$0xff]
      %v986 = vld [vmem:[%s975 + $0x50] sm:$0xff]
      %v987 = vld [vmem:[%s975 + $0x58] sm:$0x3]
      %v988 = vld [vmem:[%s975 + $0x60] sm:$0xff]
      %v989 = vld [vmem:[%s975 + $0x68] sm:$0xff]
      %v990 = vld [vmem:[%s975 + $0x70] sm:$0x3]
      %v991 = vld [vmem:[%s975 + $0x78] sm:$0xff]
      %v992 = vld [vmem:[%s975 + $0x80] sm:$0xff]
      %v993 = vld [vmem:[%s975 + $0x88] sm:$0x3]
      %v994 = vld [vmem:[%s975 + $0x90] sm:$0xff]
      %v995 = vld [vmem:[%s975 + $0x98] sm:$0xff]
      %v996 = vld [vmem:[%s975 + $0xa0] sm:$0x3]
      %v997 = vld [vmem:[%s975 + $0xa8] sm:$0xff]
      %v998 = vld [vmem:[%s975 + $0xb0] sm:$0xff]
      %v999 = vld [vmem:[%s975 + $0xb8] sm:$0x3]
      %v1000 = vmul.f32 %v309, %v976
      %v1001 = vmul.f32 %v309, %v977
      %v1002 = vmul.f32 %v309, %v978
      %v1003 = vmul.f32 %v309, %v979
      %v1004 = vmul.f32 %v309, %v980
      %v1005 = vmul.f32 %v309, %v981
      %v1006 = vmul.f32 %v309, %v982
      %v1007 = vmul.f32 %v309, %v983
      %v1008 = vmul.f32 %v309, %v984
      %v1009 = vmul.f32 %v309, %v985
      %v1010 = vmul.f32 %v309, %v986
      %v1011 = vmul.f32 %v309, %v987
      %v1012 = vmul.f32 %v309, %v988
      %v1013 = vmul.f32 %v309, %v989
      %v1014 = vmul.f32 %v309, %v990
      %v1015 = vmul.f32 %v309, %v991
      %v1016 = vmul.f32 %v309, %v992
      %v1017 = vmul.f32 %v309, %v993
      %v1018 = vmul.f32 %v309, %v994
      %v1019 = vmul.f32 %v309, %v995
      %v1020 = vmul.f32 %v309, %v996
      %v1021 = vmul.f32 %v309, %v997
      %v1022 = vmul.f32 %v309, %v998
      %v1023 = vmul.f32 %v309, %v999
      %v1024 = vadd.f32 %v951, %v1000
      %v1025 = vadd.f32 %v952, %v1001
      %v1026 = vadd.f32 %v953, %v1002
      %v1027 = vadd.f32 %v954, %v1003
      %v1028 = vadd.f32 %v955, %v1004
      %v1029 = vadd.f32 %v956, %v1005
      %v1030 = vadd.f32 %v957, %v1006
      %v1031 = vadd.f32 %v958, %v1007
      %v1032 = vadd.f32 %v959, %v1008
      %v1033 = vadd.f32 %v960, %v1009
      %v1034 = vadd.f32 %v961, %v1010
      %v1035 = vadd.f32 %v962, %v1011
      %v1036 = vadd.f32 %v963, %v1012
      %v1037 = vadd.f32 %v964, %v1013
      %v1038 = vadd.f32 %v965, %v1014
      %v1039 = vadd.f32 %v966, %v1015
      %v1040 = vadd.f32 %v967, %v1016
      %v1041 = vadd.f32 %v968, %v1017
      %v1042 = vadd.f32 %v969, %v1018
      %v1043 = vadd.f32 %v970, %v1019
      %v1044 = vadd.f32 %v971, %v1020
      %v1045 = vadd.f32 %v972, %v1021
      %v1046 = vadd.f32 %v973, %v1022
      %v1047 = vadd.f32 %v974, %v1023
      %s1048 = scalar_lea.vmem %s219, 240
      %v1049 = vld [vmem:[%s1048] sm:$0xff]
      %v1050 = vld [vmem:[%s1048 + $0x8] sm:$0xff]
      %v1051 = vld [vmem:[%s1048 + $0x10] sm:$0x3]
      %v1052 = vld [vmem:[%s1048 + $0x18] sm:$0xff]
      %v1053 = vld [vmem:[%s1048 + $0x20] sm:$0xff]
      %v1054 = vld [vmem:[%s1048 + $0x28] sm:$0x3]
      %v1055 = vld [vmem:[%s1048 + $0x30] sm:$0xff]
      %v1056 = vld [vmem:[%s1048 + $0x38] sm:$0xff]
      %v1057 = vld [vmem:[%s1048 + $0x40] sm:$0x3]
      %v1058 = vld [vmem:[%s1048 + $0x48] sm:$0xff]
      %v1059 = vld [vmem:[%s1048 + $0x50] sm:$0xff]
      %v1060 = vld [vmem:[%s1048 + $0x58] sm:$0x3]
      %v1061 = vld [vmem:[%s1048 + $0x60] sm:$0xff]
      %v1062 = vld [vmem:[%s1048 + $0x68] sm:$0xff]
      %v1063 = vld [vmem:[%s1048 + $0x70] sm:$0x3]
      %v1064 = vld [vmem:[%s1048 + $0x78] sm:$0xff]
      %v1065 = vld [vmem:[%s1048 + $0x80] sm:$0xff]
      %v1066 = vld [vmem:[%s1048 + $0x88] sm:$0x3]
      %v1067 = vld [vmem:[%s1048 + $0x90] sm:$0xff]
      %v1068 = vld [vmem:[%s1048 + $0x98] sm:$0xff]
      %v1069 = vld [vmem:[%s1048 + $0xa0] sm:$0x3]
      %v1070 = vld [vmem:[%s1048 + $0xa8] sm:$0xff]
      %v1071 = vld [vmem:[%s1048 + $0xb0] sm:$0xff]
      %v1072 = vld [vmem:[%s1048 + $0xb8] sm:$0x3]
      %v1073 = vmul.f32 %v386, %v1049
      %v1074 = vmul.f32 %v386, %v1050
      %v1075 = vmul.f32 %v386, %v1051
      %v1076 = vmul.f32 %v386, %v1052
      %v1077 = vmul.f32 %v386, %v1053
      %v1078 = vmul.f32 %v386, %v1054
      %v1079 = vmul.f32 %v386, %v1055
      %v1080 = vmul.f32 %v386, %v1056
      %v1081 = vmul.f32 %v386, %v1057
      %v1082 = vmul.f32 %v386, %v1058
      %v1083 = vmul.f32 %v386, %v1059
      %v1084 = vmul.f32 %v386, %v1060
      %v1085 = vmul.f32 %v386, %v1061
      %v1086 = vmul.f32 %v386, %v1062
      %v1087 = vmul.f32 %v386, %v1063
      %v1088 = vmul.f32 %v386, %v1064
      %v1089 = vmul.f32 %v386, %v1065
      %v1090 = vmul.f32 %v386, %v1066
      %v1091 = vmul.f32 %v386, %v1067
      %v1092 = vmul.f32 %v386, %v1068
      %v1093 = vmul.f32 %v386, %v1069
      %v1094 = vmul.f32 %v386, %v1070
      %v1095 = vmul.f32 %v386, %v1071
      %v1096 = vmul.f32 %v386, %v1072
      %v1097 = vadd.f32 %v1024, %v1073
      %v1098 = vadd.f32 %v1025, %v1074
      %v1099 = vadd.f32 %v1026, %v1075
      %v1100 = vadd.f32 %v1027, %v1076
      %v1101 = vadd.f32 %v1028, %v1077
      %v1102 = vadd.f32 %v1029, %v1078
      %v1103 = vadd.f32 %v1030, %v1079
      %v1104 = vadd.f32 %v1031, %v1080
      %v1105 = vadd.f32 %v1032, %v1081
      %v1106 = vadd.f32 %v1033, %v1082
      %v1107 = vadd.f32 %v1034, %v1083
      %v1108 = vadd.f32 %v1035, %v1084
      %v1109 = vadd.f32 %v1036, %v1085
      %v1110 = vadd.f32 %v1037, %v1086
      %v1111 = vadd.f32 %v1038, %v1087
      %v1112 = vadd.f32 %v1039, %v1088
      %v1113 = vadd.f32 %v1040, %v1089
      %v1114 = vadd.f32 %v1041, %v1090
      %v1115 = vadd.f32 %v1042, %v1091
      %v1116 = vadd.f32 %v1043, %v1092
      %v1117 = vadd.f32 %v1044, %v1093
      %v1118 = vadd.f32 %v1045, %v1094
      %v1119 = vadd.f32 %v1046, %v1095
      %v1120 = vadd.f32 %v1047, %v1096
      %v1121 = vmul.f32 %v438, %v1097
      %v1122 = vmul.f32 %v438, %v1098
      %v1123 = vmul.f32 %v438, %v1100
      %v1124 = vmul.f32 %v438, %v1101
      %v1125 = vmul.f32 %v438, %v1103
      %v1126 = vmul.f32 %v438, %v1104
      %v1127 = vmul.f32 %v438, %v1106
      %v1128 = vmul.f32 %v438, %v1107
      %v1129 = vmul.f32 %v438, %v1109
      %v1130 = vmul.f32 %v438, %v1110
      %v1131 = vmul.f32 %v438, %v1112
      %v1132 = vmul.f32 %v438, %v1113
      %v1133 = vmul.f32 %v438, %v1115
      %v1134 = vmul.f32 %v438, %v1116
      %v1135 = vmul.f32 %v438, %v1118
      %v1136 = vmul.f32 %v438, %v1119
      %v1137 = vmul.f32 %v458, %v1097
      %v1138 = vmul.f32 %v458, %v1098
      %v1139 = vmul.f32 %v458, %v1099
      %v1140 = vmul.f32 %v458, %v1100
      %v1141 = vmul.f32 %v458, %v1101
      %v1142 = vmul.f32 %v458, %v1102
      %v1143 = vmul.f32 %v458, %v1103
      %v1144 = vmul.f32 %v458, %v1104
      %v1145 = vmul.f32 %v458, %v1105
      %v1146 = vmul.f32 %v458, %v1106
      %v1147 = vmul.f32 %v458, %v1107
      %v1148 = vmul.f32 %v458, %v1108
      %v1149 = vmul.f32 %v458, %v1109
      %v1150 = vmul.f32 %v458, %v1110
      %v1151 = vmul.f32 %v458, %v1111
      %v1152 = vmul.f32 %v458, %v1112
      %v1153 = vmul.f32 %v458, %v1113
      %v1154 = vmul.f32 %v458, %v1114
      %v1155 = vmul.f32 %v458, %v1115
      %v1156 = vmul.f32 %v458, %v1116
      %v1157 = vmul.f32 %v458, %v1117
      %v1158 = vmul.f32 %v458, %v1118
      %v1159 = vmul.f32 %v458, %v1119
      %v1160 = vmul.f32 %v458, %v1120
      %v1185 = vrot.slane %v1137, 1
      %v1186 = vrot.slane %v1138, 1
      %v1187 = vsel %vm507, %v1185, %v1186
      %v1188 = vrot.slane %v1139, 1
      %v1189 = vsel %vm507, %v1186, %v1188
      %v1190 = vrot.slane %v1140, 1
      %v1191 = vrot.slane %v1141, 1
      %v1192 = vsel %vm507, %v1190, %v1191
      %v1193 = vrot.slane %v1142, 1
      %v1194 = vsel %vm507, %v1191, %v1193
      %v1195 = vrot.slane %v1143, 1
      %v1196 = vrot.slane %v1144, 1
      %v1197 = vsel %vm507, %v1195, %v1196
      %v1198 = vrot.slane %v1145, 1
      %v1199 = vsel %vm507, %v1196, %v1198
      %v1200 = vrot.slane %v1146, 1
      %v1201 = vrot.slane %v1147, 1
      %v1202 = vsel %vm507, %v1200, %v1201
      %v1203 = vrot.slane %v1148, 1
      %v1204 = vsel %vm507, %v1201, %v1203
      %v1205 = vrot.slane %v1149, 1
      %v1206 = vrot.slane %v1150, 1
      %v1207 = vsel %vm507, %v1205, %v1206
      %v1208 = vrot.slane %v1151, 1
      %v1209 = vsel %vm507, %v1206, %v1208
      %v1210 = vrot.slane %v1152, 1
      %v1211 = vrot.slane %v1153, 1
      %v1212 = vsel %vm507, %v1210, %v1211
      %v1213 = vrot.slane %v1154, 1
      %v1214 = vsel %vm507, %v1211, %v1213
      %v1215 = vrot.slane %v1155, 1
      %v1216 = vrot.slane %v1156, 1
      %v1217 = vsel %vm507, %v1215, %v1216
      %v1218 = vrot.slane %v1157, 1
      %v1219 = vsel %vm507, %v1216, %v1218
      %v1220 = vrot.slane %v1158, 1
      %v1221 = vrot.slane %v1159, 1
      %v1222 = vsel %vm507, %v1220, %v1221
      %v1223 = vrot.slane %v1160, 1
      %v1224 = vsel %vm507, %v1221, %v1223
      %v1241 = vadd.f32 %v1121, %v1187
      %v1242 = vadd.f32 %v1122, %v1189
      %v1243 = vadd.f32 %v1123, %v1192
      %v1244 = vadd.f32 %v1124, %v1194
      %v1245 = vadd.f32 %v1125, %v1197
      %v1246 = vadd.f32 %v1126, %v1199
      %v1247 = vadd.f32 %v1127, %v1202
      %v1248 = vadd.f32 %v1128, %v1204
      %v1249 = vadd.f32 %v1129, %v1207
      %v1250 = vadd.f32 %v1130, %v1209
      %v1251 = vadd.f32 %v1131, %v1212
      %v1252 = vadd.f32 %v1132, %v1214
      %v1253 = vadd.f32 %v1133, %v1217
      %v1254 = vadd.f32 %v1134, %v1219
      %v1255 = vadd.f32 %v1135, %v1222
      %v1256 = vadd.f32 %v1136, %v1224
      %v1257 = vmul.f32 %v583, %v1097
      %v1258 = vmul.f32 %v583, %v1098
      %v1259 = vmul.f32 %v583, %v1099
      %v1260 = vmul.f32 %v583, %v1100
      %v1261 = vmul.f32 %v583, %v1101
      %v1262 = vmul.f32 %v583, %v1102
      %v1263 = vmul.f32 %v583, %v1103
      %v1264 = vmul.f32 %v583, %v1104
      %v1265 = vmul.f32 %v583, %v1105
      %v1266 = vmul.f32 %v583, %v1106
      %v1267 = vmul.f32 %v583, %v1107
      %v1268 = vmul.f32 %v583, %v1108
      %v1269 = vmul.f32 %v583, %v1109
      %v1270 = vmul.f32 %v583, %v1110
      %v1271 = vmul.f32 %v583, %v1111
      %v1272 = vmul.f32 %v583, %v1112
      %v1273 = vmul.f32 %v583, %v1113
      %v1274 = vmul.f32 %v583, %v1114
      %v1275 = vmul.f32 %v583, %v1115
      %v1276 = vmul.f32 %v583, %v1116
      %v1277 = vmul.f32 %v583, %v1117
      %v1278 = vmul.f32 %v583, %v1118
      %v1279 = vmul.f32 %v583, %v1119
      %v1280 = vmul.f32 %v583, %v1120
      %v1305 = vrot.slane %v1257, 2
      %v1306 = vrot.slane %v1258, 2
      %v1307 = vsel %vm632, %v1305, %v1306
      %v1308 = vrot.slane %v1259, 2
      %v1309 = vsel %vm632, %v1306, %v1308
      %v1310 = vrot.slane %v1260, 2
      %v1311 = vrot.slane %v1261, 2
      %v1312 = vsel %vm632, %v1310, %v1311
      %v1313 = vrot.slane %v1262, 2
      %v1314 = vsel %vm632, %v1311, %v1313
      %v1315 = vrot.slane %v1263, 2
      %v1316 = vrot.slane %v1264, 2
      %v1317 = vsel %vm632, %v1315, %v1316
      %v1318 = vrot.slane %v1265, 2
      %v1319 = vsel %vm632, %v1316, %v1318
      %v1320 = vrot.slane %v1266, 2
      %v1321 = vrot.slane %v1267, 2
      %v1322 = vsel %vm632, %v1320, %v1321
      %v1323 = vrot.slane %v1268, 2
      %v1324 = vsel %vm632, %v1321, %v1323
      %v1325 = vrot.slane %v1269, 2
      %v1326 = vrot.slane %v1270, 2
      %v1327 = vsel %vm632, %v1325, %v1326
      %v1328 = vrot.slane %v1271, 2
      %v1329 = vsel %vm632, %v1326, %v1328
      %v1330 = vrot.slane %v1272, 2
      %v1331 = vrot.slane %v1273, 2
      %v1332 = vsel %vm632, %v1330, %v1331
      %v1333 = vrot.slane %v1274, 2
      %v1334 = vsel %vm632, %v1331, %v1333
      %v1335 = vrot.slane %v1275, 2
      %v1336 = vrot.slane %v1276, 2
      %v1337 = vsel %vm632, %v1335, %v1336
      %v1338 = vrot.slane %v1277, 2
      %v1339 = vsel %vm632, %v1336, %v1338
      %v1340 = vrot.slane %v1278, 2
      %v1341 = vrot.slane %v1279, 2
      %v1342 = vsel %vm632, %v1340, %v1341
      %v1343 = vrot.slane %v1280, 2
      %v1344 = vsel %vm632, %v1341, %v1343
      %v1361 = vadd.f32 %v1241, %v1307
      %v1362 = vadd.f32 %v1242, %v1309
      %v1363 = vadd.f32 %v1243, %v1312
      %v1364 = vadd.f32 %v1244, %v1314
      %v1365 = vadd.f32 %v1245, %v1317
      %v1366 = vadd.f32 %v1246, %v1319
      %v1367 = vadd.f32 %v1247, %v1322
      %v1368 = vadd.f32 %v1248, %v1324
      %v1369 = vadd.f32 %v1249, %v1327
      %v1370 = vadd.f32 %v1250, %v1329
      %v1371 = vadd.f32 %v1251, %v1332
      %v1372 = vadd.f32 %v1252, %v1334
      %v1373 = vadd.f32 %v1253, %v1337
      %v1374 = vadd.f32 %v1254, %v1339
      %v1375 = vadd.f32 %v1255, %v1342
      %v1376 = vadd.f32 %v1256, %v1344
      %v1378 = vsel %vm711, %v1361, 0
      %v1381 = vsel %vm711, %v1362, 0
      %v1384 = vsel %vm711, %v1363, 0
      %v1387 = vsel %vm711, %v1364, 0
      %v1390 = vsel %vm711, %v1365, 0
      %v1393 = vsel %vm711, %v1366, 0
      %v1396 = vsel %vm711, %v1367, 0
      %v1399 = vsel %vm711, %v1368, 0
      %v1402 = vsel %vm711, %v1369, 0
      %v1405 = vsel %vm711, %v1370, 0
      %v1408 = vsel %vm711, %v1371, 0
      %v1411 = vsel %vm711, %v1372, 0
      %v1414 = vsel %vm711, %v1373, 0
      %v1417 = vsel %vm711, %v1374, 0
      %v1420 = vsel %vm711, %v1375, 0
      %v1423 = vsel %vm711, %v1376, 0
      %1425 = vmatprep.subr.mxu0 0.0
      %1426 = vmatpush1.msra.mxu0 0.0
      %1427 = vmatprep.subr.mxu0 0.0
      %1428 = vmatpush1.msra.mxu0 0.0
      %1429 = vmatprep.subr.mxu0 0.0
      %1430 = vmatpush1.msra.mxu0 0.0
      %1431 = vmatprep.subr.mxu0 0.0
      %1432 = vmatpush1.msra.mxu0 0.0
      %1433 = vmatprep.subr.mxu0 0.0
      %1434 = vmatpush1.msra.mxu0 0.0
      %1435 = vmatprep.subr.mxu0 0.0
      %1436 = vmatpush1.msra.mxu0 0.0
      %1437 = vmatprep.subr.mxu0 0.0
      %1438 = vmatpush1.msra.mxu0 0.0
      %1439 = vmatprep.subr.mxu0 0.0
      %1440 = vmatpush1.msra.mxu0 0.0
      %1441 = vmatprep.subr.mxu0 0.0
      %1442 = vmatpush1.msra.mxu0 0.0
      %1443 = vmatprep.subr.mxu0 0.0
      %1444 = vmatpush1.msra.mxu0 0.0
      %1445 = vmatprep.subr.mxu0 0.0
      %1446 = vmatpush1.msra.mxu0 0.0
      %1447 = vmatprep.subr.mxu0 0.0
      %1448 = vmatpush1.msra.mxu0 0.0
      %1449 = vmatprep.subr.mxu0 0.0
      %1450 = vmatpush1.msra.mxu0 0.0
      %1451 = vmatprep.subr.mxu0 0.0
      %1452 = vmatpush1.msra.mxu0 0.0
      %1453 = vmatprep.subr.mxu0 0.0
      %1454 = vmatpush1.msra.mxu0 0.0
      %1455 = vmatprep.subr.mxu0 0.0
      %1456 = vmatpush1.msra.mxu0 %v762
      %1457 = vmatprep.subr.mxu0 0.0
      %1458 = vmatpush2.msra.mxu0 0.0
      %1459 = vmatprep.subr.mxu0 0.0
      %1460 = vmatpush2.msra.mxu0 0.0
      %1461 = vmatprep.subr.mxu0 0.0
      %1462 = vmatpush2.msra.mxu0 0.0
      %1463 = vmatprep.subr.mxu0 0.0
      %1464 = vmatpush2.msra.mxu0 0.0
      %1465 = vmatprep.subr.mxu0 0.0
      %1466 = vmatpush2.msra.mxu0 0.0
      %1467 = vmatprep.subr.mxu0 0.0
      %1468 = vmatpush2.msra.mxu0 0.0
      %1469 = vmatprep.subr.mxu0 0.0
      %1470 = vmatpush2.msra.mxu0 0.0
      %1471 = vmatprep.subr.mxu0 0.0
      %1472 = vmatpush2.msra.mxu0 0.0
      %1473 = vmatprep.subr.mxu0 0.0
      %1474 = vmatpush2.msra.mxu0 0.0
      %1475 = vmatprep.subr.mxu0 0.0
      %1476 = vmatpush2.msra.mxu0 0.0
      %1477 = vmatprep.subr.mxu0 0.0
      %1478 = vmatpush2.msra.mxu0 0.0
      %1479 = vmatprep.subr.mxu0 0.0
      %1480 = vmatpush2.msra.mxu0 0.0
      %1481 = vmatprep.subr.mxu0 0.0
      %1482 = vmatpush2.msra.mxu0 0.0
      %1483 = vmatprep.subr.mxu0 0.0
      %1484 = vmatpush2.msra.mxu0 0.0
      %1485 = vmatprep.subr.mxu0 0.0
      %1486 = vmatpush2.msra.mxu0 0.0
      %1487 = vmatprep.subr.mxu0 0.0
      %1488 = vmatpush2.msra.mxu0 0.0
      %1489 = vmatprep.mubr.f32.mxu0 0.0
      %1490 = vmatmul.mubr.f32.gmra.mxu0 %v1378
      %v1491 = vpop.f32.mrf.mxu0
      %v1492 = vadd.f32 %v709, %v1491
      %v1493 = vpop.f32.mrf.mxu0
      %1494 = vmatprep.mubr.f32.mxu0 0.0
      %1495 = vmatmul.mubr.f32.gmra.mxu0 %v1381
      %v1496 = vpop.f32.mrf.mxu0
      %v1497 = vadd.f32 %v709, %v1496
      %v1498 = vpop.f32.mrf.mxu0
      %1499 = vmatprep.mubr.f32.mxu0 0.0
      %1500 = vmatmul.mubr.f32.gmra.mxu0 %v1384
      %v1501 = vpop.f32.mrf.mxu0
      %v1502 = vadd.f32 %v709, %v1501
      %v1503 = vpop.f32.mrf.mxu0
      %1504 = vmatprep.mubr.f32.mxu0 0.0
      %1505 = vmatmul.mubr.f32.gmra.mxu0 %v1387
      %v1506 = vpop.f32.mrf.mxu0
      %v1507 = vadd.f32 %v709, %v1506
      %v1508 = vpop.f32.mrf.mxu0
      %1509 = vmatprep.mubr.f32.mxu0 0.0
      %1510 = vmatmul.mubr.f32.gmra.mxu0 %v1390
      %v1511 = vpop.f32.mrf.mxu0
      %v1512 = vadd.f32 %v709, %v1511
      %v1513 = vpop.f32.mrf.mxu0
      %1514 = vmatprep.mubr.f32.mxu0 0.0
      %1515 = vmatmul.mubr.f32.gmra.mxu0 %v1393
      %v1516 = vpop.f32.mrf.mxu0
      %v1517 = vadd.f32 %v709, %v1516
      %v1518 = vpop.f32.mrf.mxu0
      %1519 = vmatprep.mubr.f32.mxu0 0.0
      %1520 = vmatmul.mubr.f32.gmra.mxu0 %v1396
      %v1521 = vpop.f32.mrf.mxu0
      %v1522 = vadd.f32 %v709, %v1521
      %v1523 = vpop.f32.mrf.mxu0
      %1524 = vmatprep.mubr.f32.mxu0 0.0
      %1525 = vmatmul.mubr.f32.gmra.mxu0 %v1399
      %v1526 = vpop.f32.mrf.mxu0
      %v1527 = vadd.f32 %v709, %v1526
      %v1528 = vpop.f32.mrf.mxu0
      %1529 = vmatprep.mubr.f32.mxu0 0.0
      %1530 = vmatmul.mubr.f32.gmra.mxu0 %v1402
      %v1531 = vpop.f32.mrf.mxu0
      %v1532 = vadd.f32 %v709, %v1531
      %v1533 = vpop.f32.mrf.mxu0
      %1534 = vmatprep.mubr.f32.mxu0 0.0
      %1535 = vmatmul.mubr.f32.gmra.mxu0 %v1405
      %v1536 = vpop.f32.mrf.mxu0
      %v1537 = vadd.f32 %v709, %v1536
      %v1538 = vpop.f32.mrf.mxu0
      %1539 = vmatprep.mubr.f32.mxu0 0.0
      %1540 = vmatmul.mubr.f32.gmra.mxu0 %v1408
      %v1541 = vpop.f32.mrf.mxu0
      %v1542 = vadd.f32 %v709, %v1541
      %v1543 = vpop.f32.mrf.mxu0
      %1544 = vmatprep.mubr.f32.mxu0 0.0
      %1545 = vmatmul.mubr.f32.gmra.mxu0 %v1411
      %v1546 = vpop.f32.mrf.mxu0
      %v1547 = vadd.f32 %v709, %v1546
      %v1548 = vpop.f32.mrf.mxu0
      %1549 = vmatprep.mubr.f32.mxu0 0.0
      %1550 = vmatmul.mubr.f32.gmra.mxu0 %v1414
      %v1551 = vpop.f32.mrf.mxu0
      %v1552 = vadd.f32 %v709, %v1551
      %v1553 = vpop.f32.mrf.mxu0
      %1554 = vmatprep.mubr.f32.mxu0 0.0
      %1555 = vmatmul.mubr.f32.gmra.mxu0 %v1417
      %v1556 = vpop.f32.mrf.mxu0
      %v1557 = vadd.f32 %v709, %v1556
      %v1558 = vpop.f32.mrf.mxu0
      %1559 = vmatprep.mubr.f32.mxu0 0.0
      %1560 = vmatmul.mubr.f32.gmra.mxu0 %v1420
      %v1561 = vpop.f32.mrf.mxu0
      %v1562 = vadd.f32 %v709, %v1561
      %v1563 = vpop.f32.mrf.mxu0
      %1564 = vmatprep.mubr.f32.mxu0 0.0
      %1565 = vmatmul.mubr.f32.gmra.mxu0 %v1423
      %v1566 = vpop.f32.mrf.mxu0
      %v1567 = vadd.f32 %v709, %v1566
      %v1568 = vpop.f32.mrf.mxu0
      %1569 = vdwg.mxu0
      %s1570 = scalar_lea.vmem %s224, 128
      %1571 = vst.msk [vmem:[%s1570] sm:$0xff] %vm909, %v1492
      %1572 = vst.msk [vmem:[%s1570 + $0x8] sm:$0xff] %vm909, %v1497
      %1573 = vst.msk [vmem:[%s1570 + $0x10] sm:$0xff] %vm909, %v1502
      %1574 = vst.msk [vmem:[%s1570 + $0x18] sm:$0xff] %vm909, %v1507
      %1575 = vst.msk [vmem:[%s1570 + $0x20] sm:$0xff] %vm909, %v1512
      %1576 = vst.msk [vmem:[%s1570 + $0x28] sm:$0xff] %vm909, %v1517
      %1577 = vst.msk [vmem:[%s1570 + $0x30] sm:$0xff] %vm909, %v1522
      %1578 = vst.msk [vmem:[%s1570 + $0x38] sm:$0xff] %vm909, %v1527
      %1579 = vst.msk [vmem:[%s1570 + $0x40] sm:$0xff] %vm909, %v1532
      %1580 = vst.msk [vmem:[%s1570 + $0x48] sm:$0xff] %vm909, %v1537
      %1581 = vst.msk [vmem:[%s1570 + $0x50] sm:$0xff] %vm909, %v1542
      %1582 = vst.msk [vmem:[%s1570 + $0x58] sm:$0xff] %vm909, %v1547
      %1583 = vst.msk [vmem:[%s1570 + $0x60] sm:$0xff] %vm909, %v1552
      %1584 = vst.msk [vmem:[%s1570 + $0x68] sm:$0xff] %vm909, %v1557
      %1585 = vst.msk [vmem:[%s1570 + $0x70] sm:$0xff] %vm909, %v1562
      %1586 = vst.msk [vmem:[%s1570 + $0x78] sm:$0xff] %vm909, %v1567
      %p1587 = scmp.lt.s32.totalorder %s16, 1
      %s1588 = scalar_select %p1587, %s16, 1
      %s1589 = smul.addr %s1588, 32
      %s1590 = smul.addr %s1589, 8
      %s1591 = scalar_lea.vmem %s5, %s1590
      // Predicated region
      $region41: #{tpu_custom_call.1} parent=39 // pred_check
        %p1592 = pneg %p144
      $region42: #{tpu_custom_call.1} parent=39 // pred_check_branch
        %1594 = sbr.rel (%p1592) target = $region44
      $region43: #{tpu_custom_call.1} parent=39 // pred_region
        _
      $region44: #{tpu_custom_call.1} parent=39 // pred_fallthru
        _
    $region40: #{tpu_custom_call.1} parent=5 // pred_fallthru
      _
    %p1595 = scmp.le.s32.totalorder 2, %s11
    // Predicated region
    $region45: #{tpu_custom_call.1} parent=5 // pred_check
      %p1596 = pneg %p1595
    $region46: #{tpu_custom_call.1} parent=5 // pred_check_branch
      %1598 = sbr.rel (%p1596) target = $region48
    $region47: #{tpu_custom_call.1} parent=5 // pred_region
      %s1599 = ssub.s32 %s11, 2
      // Predicated region
      $region49: #{tpu_custom_call.1} parent=47 // pred_check
        %p1600 = pneg %p150
      $region50: #{tpu_custom_call.1} parent=47 // pred_check_branch
        %1602 = sbr.rel (%p1600) target = $region52
      $region51: #{tpu_custom_call.1} parent=47 // pred_region
        %p1603 = scmp.lt.s32.totalorder %s17, 1
        %s1604 = scalar_select %p1603, %s17, 1
        %s1605 = smul.addr %s1604, 32
        %s1606 = smul.addr %s1605, 8
        %s1607 = scalar_lea.vmem %s5, %s1606
      $region52: #{tpu_custom_call.1} parent=47 // pred_fallthru
        _
    $region48: #{tpu_custom_call.1} parent=5 // pred_fallthru
      _
  $region6: #{tpu_custom_call.1} parent=0 // loop_footer
    %s15 = sadd.s32 1, %s11
  $region7: #{tpu_custom_call.1} parent=0 // loop_footer_branch
    %10 = sbr.rel target = $region3
  $region8: #{tpu_custom_call.1} parent=0 // loop_exit
    _

</llo_original>
